<compile_context>
chip_gen: v6e
topology: v6e:2x2x1
jax: 0.10.0
libtpu: 0.0.40
codegen_flags: <defaults>
</compile_context>

<pallas_src>
import jax
import jax.numpy as jnp
from jax.experimental import pallas as pl
from jax.experimental.pallas import tpu as pltpu


def _round_up(x, m):
    return ((x + m - 1) // m) * m


def pam_kernel(x_ref, wb_ref, bb_ref, wc_ref, bc_ref, wd_ref, bd_ref, alpha_ref,
               o_ref, c_scr, d_scr):
    # x_ref : (HW, Cp)    one batch element, channel-padded, channels on lanes
    # wb/wc : (Cp, C8p)   zero-padded 1x1 conv weights;  wd: (Cp, Cp)
    # bb/bc : (1, C8p)    zero-padded biases;            bd: (1, Cp)
    # alpha : (1, 1)      scalar in SMEM
    # o_ref : (TQ, Cp)    current query tile of the output
    # c_scr : (HW, C8p)   key projection   (computed once per batch element)
    # d_scr : (HW, Cp)    value projection (computed once per batch element)
    qi = pl.program_id(1)
    tq = o_ref.shape[0]

    @pl.when(qi == 0)
    def _():
        xf = x_ref[...]
        c_scr[...] = (jnp.dot(xf, wc_ref[...],
                              preferred_element_type=jnp.float32) + bc_ref[...])
        d_scr[...] = (jnp.dot(xf, wd_ref[...],
                              preferred_element_type=jnp.float32) + bd_ref[...])

    q0 = pl.multiple_of(qi * tq, tq)
    xq = x_ref[pl.ds(q0, tq), :]                                    # (TQ, Cp)

    bq = (jnp.dot(xq, wb_ref[...],
                  preferred_element_type=jnp.float32) + bb_ref[...])  # (TQ, C8p)

    # energy[i, j] = <query_i, key_j>   ->  (TQ, HW)
    energy = jax.lax.dot_general(bq, c_scr[...],
                                 (((1,), (1,)), ((), ())),
                                 preferred_element_type=jnp.float32)

    # numerically stable row softmax
    m = jnp.max(energy, axis=-1, keepdims=True)
    p = jnp.exp(energy - m)
    denom = jnp.sum(p, axis=-1, keepdims=True)
    attn = p / denom                                                # (TQ, HW)

    e = jnp.dot(attn, d_scr[...],
                preferred_element_type=jnp.float32)                 # (TQ, Cp)
    o_ref[...] = (alpha_ref[0, 0] * e + xq).astype(o_ref.dtype)


def position_attention(x_nchw, wb, bb, wc, bc, wd, bd, alpha, *, q_tile=128):
    """Pallas forward of _PositionAttentionModule.
    x: (N, C, H, W) f32; conv weights in PyTorch OIHW (1x1) layout; alpha scalar."""
    N, C, H, W = x_nchw.shape
    C8 = wb.shape[0]                      # = in_channels // 8
    HW = H * W

    Cp = _round_up(C, 128)                # lane-dense channel widths
    C8p = _round_up(C8, 128)
    TQ = min(q_tile, HW)
    assert HW % TQ == 0 and TQ % 8 == 0, "H*W must be divisible by the query tile"

    # NCHW -> (N, HW, C), zero-pad channels to the lane-dense width.
    xf = jnp.transpose(x_nchw, (0, 2, 3, 1)).reshape(N, HW, C)
    xf = jnp.pad(xf, ((0, 0), (0, 0), (0, Cp - C)))

    def prep_w(w_oihw, ip, op):
        w2 = jnp.transpose(w_oihw[:, :, 0, 0], (1, 0))          # (I, O)
        return jnp.pad(w2, ((0, ip - w2.shape[0]), (0, op - w2.shape[1])))

    def prep_b(b, op):
        return jnp.pad(b, (0, op - b.shape[0])).reshape(1, op)

    wbp, bbp = prep_w(wb, Cp, C8p), prep_b(bb, C8p)
    wcp, bcp = prep_w(wc, Cp, C8p), prep_b(bc, C8p)
    wdp, bdp = prep_w(wd, Cp, Cp), prep_b(bd, Cp)
    alpha2 = jnp.asarray(alpha, jnp.float32).reshape(1, 1)

    flops = N * (2 * 2 * HW * Cp * C8p        # conv_b + conv_c
                 + 2 * HW * Cp * Cp           # conv_d
                 + 2 * HW * HW * C8p          # energy
                 + 2 * HW * HW * Cp)          # attn @ value
    bytes_accessed = 4 * (2 * N * HW * Cp + 2 * Cp * C8p + Cp * Cp
                          + 2 * C8p + Cp + 1)

    out = pl.pallas_call(
        pam_kernel,
        out_shape=jax.ShapeDtypeStruct((N, HW, Cp), x_nchw.dtype),
        grid_spec=pltpu.PrefetchScalarGridSpec(
            num_scalar_prefetch=0,
            grid=(N, HW // TQ),
            in_specs=[
                pl.BlockSpec((None, HW, Cp), lambda n, q: (n, 0, 0)),   # x
                pl.BlockSpec((Cp, C8p), lambda n, q: (0, 0)),           # Wb
                pl.BlockSpec((1, C8p), lambda n, q: (0, 0)),            # bb
                pl.BlockSpec((Cp, C8p), lambda n, q: (0, 0)),           # Wc
                pl.BlockSpec((1, C8p), lambda n, q: (0, 0)),            # bc
                pl.BlockSpec((Cp, Cp), lambda n, q: (0, 0)),            # Wd
                pl.BlockSpec((1, Cp), lambda n, q: (0, 0)),             # bd
                pl.BlockSpec(memory_space=pltpu.MemorySpace.SMEM),      # alpha
            ],
            out_specs=pl.BlockSpec((None, TQ, Cp), lambda n, q: (n, q, 0)),
            scratch_shapes=[
                pltpu.VMEM((HW, C8p), jnp.float32),   # key projection
                pltpu.VMEM((HW, Cp), jnp.float32),    # value projection
            ],
        ),
        compiler_params=pltpu.CompilerParams(
            dimension_semantics=("parallel", "arbitrary")),
        cost_estimate=pl.CostEstimate(
            flops=flops, transcendentals=N * HW * HW,
            bytes_accessed=bytes_accessed),
    )(xf, wbp, bbp, wcp, bcp, wdp, bdp, alpha2)

    out = out[:, :, :C].reshape(N, H, W, C)
    return jnp.transpose(out, (0, 3, 1, 2))


def ref_forward(x, wb, bb, wc, bc, wd, bd, alpha):
    """Pure-JAX mirror of the PyTorch _PositionAttentionModule.forward."""
    N, C, H, W = x.shape
    HW = H * W
    hp = jax.lax.Precision.HIGHEST

    def conv1x1(inp, w, b):
        return (jnp.einsum('nchw,oc->nohw', inp, w[:, :, 0, 0], precision=hp)
                + b.reshape(1, -1, 1, 1))

    feat_b = conv1x1(x, wb, bb).reshape(N, -1, HW).transpose(0, 2, 1)  # (N,HW,C8)
    feat_c = conv1x1(x, wc, bc).reshape(N, -1, HW)                     # (N,C8,HW)
    energy = jnp.einsum('nik,nkj->nij', feat_b, feat_c, precision=hp)  # (N,HW,HW)
    attn = jax.nn.softmax(energy, axis=-1)
    feat_d = conv1x1(x, wd, bd).reshape(N, -1, HW)                     # (N,C,HW)
    feat_e = jnp.einsum('ncj,nij->nci', feat_d, attn,
                        precision=hp).reshape(N, C, H, W)
    return alpha * feat_e + x


if __name__ == "__main__":
    key = jax.random.PRNGKey(0)
    # in_channels must be >= 8 so that in_channels // 8 >= 1 (as the module implies)
    N, C, H, W = 2, 32, 16, 16
    C8 = C // 8
    ks = jax.random.split(key, 8)

    x = jax.random.normal(ks[0], (N, C, H, W), dtype=jnp.float32)
    wb = jax.random.normal(ks[1], (C8, C, 1, 1), dtype=jnp.float32) * 0.1
    bb = jax.random.normal(ks[2], (C8,), dtype=jnp.float32) * 0.1
    wc = jax.random.normal(ks[3], (C8, C, 1, 1), dtype=jnp.float32) * 0.1
    bc = jax.random.normal(ks[4], (C8,), dtype=jnp.float32) * 0.1
    wd = jax.random.normal(ks[5], (C, C, 1, 1), dtype=jnp.float32) * 0.1
    bd = jax.random.normal(ks[6], (C,), dtype=jnp.float32) * 0.1
    # PyTorch initializes alpha to 0 (out == x trivially); use a nonzero value
    # here so the attention path is actually exercised by the check.
    alpha = jnp.float32(0.75)

    out = position_attention(x, wb, bb, wc, bc, wd, bd, alpha)
    jax.block_until_ready(out)

    ref = ref_forward(x, wb, bb, wc, bc, wd, bd, alpha)
    assert out.shape == ref.shape == (N, C, H, W)
    assert jnp.allclose(out, ref, atol=2e-3, rtol=2e-3), "mismatch vs reference"

    print("KERNEL_OK")
</pallas_src>

<mosaic_0001>
module attributes {stable_mosaic.version = 11 : i64} {
  func.func @pam_kernel(%arg0: i32, %arg1: i32, %arg2: memref<1x256x128xf32, #tpu.memory_space<vmem>>, %arg3: memref<128x128xf32, #tpu.memory_space<vmem>>, %arg4: memref<1x128xf32, #tpu.memory_space<vmem>>, %arg5: memref<128x128xf32, #tpu.memory_space<vmem>>, %arg6: memref<1x128xf32, #tpu.memory_space<vmem>>, %arg7: memref<128x128xf32, #tpu.memory_space<vmem>>, %arg8: memref<1x128xf32, #tpu.memory_space<vmem>>, %arg9: memref<1x1xf32, #tpu.memory_space<smem>>, %arg10: memref<1x128x128xf32, #tpu.memory_space<vmem>>, %arg11: memref<256x128xf32, #tpu.memory_space<vmem>>, %arg12: memref<256x128xf32, #tpu.memory_space<vmem>>) attributes {dimension_semantics = [#tpu.dimension_semantics<parallel>, #tpu.dimension_semantics<arbitrary>], iteration_bounds = array<i64: 2, 2>, scalar_prefetch = 0 : i64, scratch_operands = 2 : i64, tpu.core_type = #tpu.core_type<tc>, window_params = [{transform_indices = @transform_0, window_bounds = array<i64: 1, 256, 128>}, {pipeline_mode = #tpu.pipeline_mode<synchronous>, transform_indices = @transform_1, window_bounds = array<i64: 128, 128>}, {pipeline_mode = #tpu.pipeline_mode<synchronous>, transform_indices = @transform_2, window_bounds = array<i64: 1, 128>}, {pipeline_mode = #tpu.pipeline_mode<synchronous>, transform_indices = @transform_3, window_bounds = array<i64: 128, 128>}, {pipeline_mode = #tpu.pipeline_mode<synchronous>, transform_indices = @transform_4, window_bounds = array<i64: 1, 128>}, {pipeline_mode = #tpu.pipeline_mode<synchronous>, transform_indices = @transform_5, window_bounds = array<i64: 128, 128>}, {pipeline_mode = #tpu.pipeline_mode<synchronous>, transform_indices = @transform_6, window_bounds = array<i64: 1, 128>}, {transform_indices = @transform_7, window_bounds = array<i64: 1, 1>}, {transform_indices = @transform_8, window_bounds = array<i64: 1, 128, 128>}]} {
    %c0_i32 = arith.constant 0 : i32
    %0 = arith.cmpi eq, %arg1, %c0_i32 : i32
    %1 = arith.extui %0 : i1 to i32
    %c0_i32_0 = arith.constant 0 : i32
    %2 = arith.cmpi ne, %1, %c0_i32_0 : i32
    scf.if %2 {
      %c0_19 = arith.constant 0 : index
      %c0_20 = arith.constant 0 : index
      %c0_21 = arith.constant 0 : index
      %33 = vector.load %arg2[%c0_19, %c0_20, %c0_21] : memref<1x256x128xf32, #tpu.memory_space<vmem>>, vector<1x256x128xf32>
      %34 = vector.shape_cast %33 : vector<1x256x128xf32> to vector<256x128xf32>
      %c0_22 = arith.constant 0 : index
      %c0_23 = arith.constant 0 : index
      %35 = vector.load %arg5[%c0_22, %c0_23] : memref<128x128xf32, #tpu.memory_space<vmem>>, vector<128x128xf32>
      %cst_24 = arith.constant dense<0.000000e+00> : vector<256x128xf32>
      %36 = tpu.matmul %34, %35, %cst_24 {dimension_numbers = #tpu.dot_dimension_numbers<[1], [0], [0], [1], [0, 0, 1, 1], [], []>} : vector<256x128xf32>, vector<128x128xf32>, vector<256x128xf32> -> vector<256x128xf32>
      %c0_25 = arith.constant 0 : index
      %c0_26 = arith.constant 0 : index
      %37 = vector.load %arg6[%c0_25, %c0_26] : memref<1x128xf32, #tpu.memory_space<vmem>>, vector<1x128xf32>
      %38 = vector.broadcast %37 : vector<1x128xf32> to vector<256x128xf32>
      %39 = arith.addf %36, %38 : vector<256x128xf32>
      %c0_27 = arith.constant 0 : index
      %c0_28 = arith.constant 0 : index
      %40 = vector.load %arg11[%c0_27, %c0_28] : memref<256x128xf32, #tpu.memory_space<vmem>>, vector<256x128xf32>
      tpu.vector_store %arg11[%c0_27, %c0_28], %39 {strides = array<i32>} : memref<256x128xf32, #tpu.memory_space<vmem>>, vector<256x128xf32>,
      %c0_29 = arith.constant 0 : index
      %c0_30 = arith.constant 0 : index
      %41 = vector.load %arg7[%c0_29, %c0_30] : memref<128x128xf32, #tpu.memory_space<vmem>>, vector<128x128xf32>
      %cst_31 = arith.constant dense<0.000000e+00> : vector<256x128xf32>
      %42 = tpu.matmul %34, %41, %cst_31 {dimension_numbers = #tpu.dot_dimension_numbers<[1], [0], [0], [1], [0, 0, 1, 1], [], []>} : vector<256x128xf32>, vector<128x128xf32>, vector<256x128xf32> -> vector<256x128xf32>
      %c0_32 = arith.constant 0 : index
      %c0_33 = arith.constant 0 : index
      %43 = vector.load %arg8[%c0_32, %c0_33] : memref<1x128xf32, #tpu.memory_space<vmem>>, vector<1x128xf32>
      %44 = vector.broadcast %43 : vector<1x128xf32> to vector<256x128xf32>
      %45 = arith.addf %42, %44 : vector<256x128xf32>
      %c0_34 = arith.constant 0 : index
      %c0_35 = arith.constant 0 : index
      %46 = vector.load %arg12[%c0_34, %c0_35] : memref<256x128xf32, #tpu.memory_space<vmem>>, vector<256x128xf32>
      tpu.vector_store %arg12[%c0_34, %c0_35], %45 {strides = array<i32>} : memref<256x128xf32, #tpu.memory_space<vmem>>, vector<256x128xf32>,
    } else {
    }
    %c128_i32 = arith.constant 128 : i32
    %3 = arith.muli %arg1, %c128_i32 : i32
    %4 = tpu.assume_multiple %3, 128 : i32
    %c0 = arith.constant 0 : index
    %5 = arith.index_cast %4 : i32 to index
    %c0_1 = arith.constant 0 : index
    %6 = vector.load %arg2[%c0, %5, %c0_1] : memref<1x256x128xf32, #tpu.memory_space<vmem>>, vector<1x128x128xf32>
    %7 = vector.shape_cast %6 : vector<1x128x128xf32> to vector<128x128xf32>
    %c0_2 = arith.constant 0 : index
    %c0_3 = arith.constant 0 : index
    %8 = vector.load %arg3[%c0_2, %c0_3] : memref<128x128xf32, #tpu.memory_space<vmem>>, vector<128x128xf32>
    %cst = arith.constant dense<0.000000e+00> : vector<128x128xf32>
    %9 = tpu.matmul %7, %8, %cst {dimension_numbers = #tpu.dot_dimension_numbers<[1], [0], [0], [1], [0, 0, 1, 1], [], []>} : vector<128x128xf32>, vector<128x128xf32>, vector<128x128xf32> -> vector<128x128xf32>
    %c0_4 = arith.constant 0 : index
    %c0_5 = arith.constant 0 : index
    %10 = vector.load %arg4[%c0_4, %c0_5] : memref<1x128xf32, #tpu.memory_space<vmem>>, vector<1x128xf32>
    %11 = vector.broadcast %10 : vector<1x128xf32> to vector<128x128xf32>
    %12 = arith.addf %9, %11 : vector<128x128xf32>
    %c0_6 = arith.constant 0 : index
    %c0_7 = arith.constant 0 : index
    %13 = vector.load %arg11[%c0_6, %c0_7] : memref<256x128xf32, #tpu.memory_space<vmem>>, vector<256x128xf32>
    %cst_8 = arith.constant dense<0.000000e+00> : vector<128x256xf32>
    %14 = tpu.matmul %12, %13, %cst_8 {dimension_numbers = #tpu.dot_dimension_numbers<[1], [1], [0], [0], [0, 0, 1, 0], [], []>} : vector<128x128xf32>, vector<256x128xf32>, vector<128x256xf32> -> vector<128x256xf32>
    %cst_9 = arith.constant dense<0xFF800000> : vector<128xf32>
    %15 = vector.multi_reduction <maximumf>, %14, %cst_9 [1] : vector<128x256xf32> to vector<128xf32>
    %16 = vector.shape_cast %15 : vector<128xf32> to vector<128x1xf32>
    %17 = vector.broadcast %16 : vector<128x1xf32> to vector<128x256xf32>
    %18 = arith.subf %14, %17 : vector<128x256xf32>
    %19 = math.exp %18 : vector<128x256xf32>
    %cst_10 = arith.constant dense<0.000000e+00> : vector<128xf32>
    %20 = vector.multi_reduction <add>, %19, %cst_10 [1] : vector<128x256xf32> to vector<128xf32>
    %21 = vector.shape_cast %20 : vector<128xf32> to vector<128x1xf32>
    %22 = vector.broadcast %21 : vector<128x1xf32> to vector<128x256xf32>
    %23 = arith.divf %19, %22 : vector<128x256xf32>
    %c0_11 = arith.constant 0 : index
    %c0_12 = arith.constant 0 : index
    %24 = vector.load %arg12[%c0_11, %c0_12] : memref<256x128xf32, #tpu.memory_space<vmem>>, vector<256x128xf32>
    %cst_13 = arith.constant dense<0.000000e+00> : vector<128x128xf32>
    %25 = tpu.matmul %23, %24, %cst_13 {dimension_numbers = #tpu.dot_dimension_numbers<[1], [0], [0], [1], [0, 0, 1, 1], [], []>} : vector<128x256xf32>, vector<256x128xf32>, vector<128x128xf32> -> vector<128x128xf32>
    %c0_14 = arith.constant 0 : index
    %c0_15 = arith.constant 0 : index
    %26 = memref.load %arg9[%c0_14, %c0_15] : memref<1x1xf32, #tpu.memory_space<smem>>
    %27 = vector.broadcast %26 : f32 to vector<128x128xf32>
    %28 = arith.mulf %27, %25 : vector<128x128xf32>
    %29 = arith.addf %28, %7 : vector<128x128xf32>
    %c0_16 = arith.constant 0 : index
    %c0_17 = arith.constant 0 : index
    %c0_18 = arith.constant 0 : index
    %30 = vector.load %arg10[%c0_16, %c0_17, %c0_18] : memref<1x128x128xf32, #tpu.memory_space<vmem>>, vector<1x128x128xf32>
    %31 = vector.shape_cast %30 : vector<1x128x128xf32> to vector<128x128xf32>
    %32 = vector.shape_cast %29 : vector<128x128xf32> to vector<1x128x128xf32>
    tpu.vector_store %arg10[%c0_16, %c0_17, %c0_18], %32 {strides = array<i32>} : memref<1x128x128xf32, #tpu.memory_space<vmem>>, vector<1x128x128xf32>,
    return
  }
  func.func @transform_0(%arg0: i32, %arg1: i32) -> (i32, i32, i32) {
    %c0_i32 = arith.constant 0 : i32
    %c0_i32_0 = arith.constant 0 : i32
    %c0_i32_1 = arith.constant 0 : i32
    return %arg0, %c0_i32, %c0_i32_0 : i32, i32, i32
  }
  func.func @transform_1(%arg0: i32, %arg1: i32) -> (i32, i32) {
    %c0_i32 = arith.constant 0 : i32
    %c0_i32_0 = arith.constant 0 : i32
    %c0_i32_1 = arith.constant 0 : i32
    return %c0_i32, %c0_i32_0 : i32, i32
  }
  func.func @transform_2(%arg0: i32, %arg1: i32) -> (i32, i32) {
    %c0_i32 = arith.constant 0 : i32
    %c0_i32_0 = arith.constant 0 : i32
    %c0_i32_1 = arith.constant 0 : i32
    return %c0_i32, %c0_i32_0 : i32, i32
  }
  func.func @transform_3(%arg0: i32, %arg1: i32) -> (i32, i32) {
    %c0_i32 = arith.constant 0 : i32
    %c0_i32_0 = arith.constant 0 : i32
    %c0_i32_1 = arith.constant 0 : i32
    return %c0_i32, %c0_i32_0 : i32, i32
  }
  func.func @transform_4(%arg0: i32, %arg1: i32) -> (i32, i32) {
    %c0_i32 = arith.constant 0 : i32
    %c0_i32_0 = arith.constant 0 : i32
    %c0_i32_1 = arith.constant 0 : i32
    return %c0_i32, %c0_i32_0 : i32, i32
  }
  func.func @transform_5(%arg0: i32, %arg1: i32) -> (i32, i32) {
    %c0_i32 = arith.constant 0 : i32
    %c0_i32_0 = arith.constant 0 : i32
    %c0_i32_1 = arith.constant 0 : i32
    return %c0_i32, %c0_i32_0 : i32, i32
  }
  func.func @transform_6(%arg0: i32, %arg1: i32) -> (i32, i32) {
    %c0_i32 = arith.constant 0 : i32
    %c0_i32_0 = arith.constant 0 : i32
    %c0_i32_1 = arith.constant 0 : i32
    return %c0_i32, %c0_i32_0 : i32, i32
  }
  func.func @transform_7(%arg0: i32, %arg1: i32) -> (i32, i32) {
    %c0_i32 = arith.constant 0 : i32
    %c0_i32_0 = arith.constant 0 : i32
    %c0_i32_1 = arith.constant 0 : i32
    return %c0_i32, %c0_i32_0 : i32, i32
  }
  func.func @transform_8(%arg0: i32, %arg1: i32) -> (i32, i32, i32) {
    %c0_i32 = arith.constant 0 : i32
    %c0_i32_0 = arith.constant 0 : i32
    return %arg0, %arg1, %c0_i32 : i32, i32, i32
  }
}

</mosaic_0001>

<llo_original>
// kernel: tpu_custom_call.1
$region0: #{tpu_custom_call.1}
  #allocation0 [shape = 'u32[]', space=smem, size = 0x4, offset = 0x4, fixed_abs, tag = 'smem constant byte address 0x4 - core index']
  #allocation1 [shape = 'u32[144,128]{1,0:T(1,128)}', space=vmem, size = 0x12000, scoped, tag = 'internal scratch']
  #allocation2 [shape = 'f32[256,128]{1,0:T(8,128)}', space=vmem, size = 0x20000, scoped, tag = 'scratch operand']
  #allocation3 [shape = 'f32[256,128]{1,0:T(8,128)}', space=vmem, size = 0x20000, scoped, tag = 'scratch operand']
  #allocation4 [shape = 'f32[1,1]{1,0:T(1,128)S(6)}', space=smem, size = 0x200, scoped, tag = 'scoped memory for tpu_custom_call.1']
  %s0 = inlined_call_operand.hbm [shape: f32[2,256,128], index: 0, kind: input, shape index: {}]
  %s1 = inlined_call_operand.hbm [shape: f32[128,128], index: 1, kind: input, shape index: {}]
  %s2 = inlined_call_operand.vmem [shape: f32[1,128], index: 2, kind: input, shape index: {}]
  %s3 = inlined_call_operand.hbm [shape: f32[128,128], index: 3, kind: input, shape index: {}]
  %s4 = inlined_call_operand.vmem [shape: f32[1,128], index: 4, kind: input, shape index: {}]
  %s5 = inlined_call_operand.hbm [shape: f32[128,128], index: 5, kind: input, shape index: {}]
  %s6 = inlined_call_operand.vmem [shape: f32[1,128], index: 6, kind: input, shape index: {}]
  %s7 = inlined_call_operand.<no memory space> [shape: f32[1,1], index: 7, kind: input, shape index: {}]
  %s8 = inlined_call_operand.hbm [shape: f32[2,256,128], index: 8, kind: output, shape index: {}]
  %s9 = sld [smem:[#allocation0]]
  $region85: #{tpu_custom_call.1} parent=0
    _
  %s11 = ssub.s32 1, %s9
  %s12 = scalar_select 0, %s11, %s9
  %13 = sst [smem:[#allocation4]] %s7
  $region1: #{tpu_custom_call.1} parent=0
    #allocation5 [shape = 'u8[262144]{0}', space=vmem, size = 0x40000, scoped, tag = 'input window, operand 0']
    #allocation6 [shape = 's32[2]{0}', space=sflag, size = 0x8, scoped, tag = 'scoped memory for tpu_custom_call.1']
    #allocation7 [shape = 's32[2]{0}', space=sflag, size = 0x8, scoped, tag = 'scoped memory for tpu_custom_call.1']
    #allocation8 [shape = 'u8[65536]{0}', space=vmem, size = 0x10000, scoped, tag = 'input window, operand 1, single buffered']
    #allocation9 [shape = 's32[1]{0}', space=sflag, size = 0x4, scoped, tag = 'scoped memory for tpu_custom_call.1']
    #allocation10 [shape = 'u8[65536]{0}', space=vmem, size = 0x10000, scoped, tag = 'input window, operand 3, single buffered']
    #allocation11 [shape = 'u8[65536]{0}', space=vmem, size = 0x10000, scoped, tag = 'input window, operand 5, single buffered']
    #allocation12 [shape = 's32[1]{0}', space=sflag, size = 0x4, scoped, tag = 'scoped memory for tpu_custom_call.1']
    #allocation13 [shape = 'u8[131072]{0}', space=vmem, size = 0x20000, scoped, tag = 'output window, operand 0']
    %14 = vsyncpa [#allocation6], 0
    %s15 = scalar_lea.sflag [#allocation6], 1
    %16 = vsyncpa %s15, 0
    %17 = vsyncpa [#allocation9], 0
    %18 = vsyncpa [#allocation12], 0
    %19 = vsyncpa [#allocation7], 0
    %s20 = scalar_lea.sflag [#allocation7], 1
    %21 = vsyncpa %s20, 0
    loop: start=0, step=1, limit=6
    $region2: #{tpu_custom_call.1} parent=1 // loop_pre_header
      _
    $region3: #{tpu_custom_call.1} parent=1 // loop_header
      %s23 = sphi 0, %s27
      %p24 = scmp.ge.s32.totalorder %s23, 6
      %s30 = sphi 0, %s42
      %s31 = sphi 0, %s38
      %s32 = sphi 0, %s30
      %s33 = sphi 0, %s31
      %s34 = sphi 0, %s32
      %s35 = sphi 0, %s33
      %s45 = sphi 0, %s47
      %s48 = sphi 0, %s45
      %s49 = sphi 0, %s48
      %s65 = sphi 0, %s49
      %s69 = sphi 0, %s69
      %s71 = sphi 0, %s69
      %s72 = sphi 0, %s71
      %s86 = sphi 0, %s72
      %s90 = sphi 0, %s90
      %s92 = sphi 0, %s90
      %s93 = sphi 0, %s92
      %s107 = sphi 0, %s93
      %s111 = sphi 0, %s111
      %s113 = sphi 0, %s111
      %s114 = sphi 0, %s113
      %s128 = sphi 0, %s114
      %s132 = sphi 0, %s132
      %s134 = sphi 0, %s132
      %s135 = sphi 0, %s134
      %s149 = sphi 0, %s135
      %s153 = sphi 0, %s153
      %s155 = sphi 0, %s153
      %s156 = sphi 0, %s155
      %s170 = sphi 0, %s156
      %s174 = sphi 0, %s174
      %s176 = sphi 0, %s174
      %s177 = sphi 0, %s176
      %s191 = sphi 0, %s177
      %s195 = sphi 0, %s195
      %s197 = sphi 0, %s195
      %s198 = sphi 0, %s197
      %s212 = sphi 0, %s198
      %s220 = sphi 0, %s222
      %s223 = sphi 0, %s220
      %s224 = sphi 0, %s223
      %s240 = sphi 0, %s224
    $region4: #{tpu_custom_call.1} parent=1 // loop_header_branch
      %26 = sbr.rel (%p24) target = $region8
    $region5: #{tpu_custom_call.1} parent=1 // loop_body
      %s28 = ssub.s32 %s23, 1
      %s29 = ssub.s32 %s23, 2
      %s36 = sadd.s32 1, %s31
      %p37 = scmp.ge.s32.totalorder %s36, 2
      %s38 = scalar_select %p37, 0, %s36
      %s39 = sadd.s32 1, %s30
      %s40 = scalar_select %p37, %s39, %s30
      %p41 = scmp.ge.s32.totalorder %s40, 2
      %s42 = scalar_select %p41, 0, %s40
      %s43 = ssub.s32 %s30, %s42
      %p44 = scmp.eq.s32.totalorder %s43, 0
      %s46 = sadd.s32 %s45, 1
      %s47 = scalar_select %p44, %s45, %s46
      %p50 = pneg %p44
      %p51 = scmp.eq.s32.totalorder %s23, 3
      %p52 = por %p50, %p51
      %p53 = scmp.ne.s32.totalorder %s45, %s48
      %p54 = scmp.eq.s32.totalorder %s23, 0
      %p55 = por %p53, %p54
      %p56 = scmp.ne.s32.totalorder %s45, %s48
      %p57 = scmp.eq.s32.totalorder %s28, 3
      %p58 = por %p56, %p57
      %p59 = scmp.ne.s32.totalorder %s48, %s49
      %p60 = scmp.eq.s32.totalorder %s28, 0
      %p61 = por %p59, %p60
      %p62 = scmp.ne.s32.totalorder %s48, %s49
      %p63 = scmp.eq.s32.totalorder %s29, 3
      %p64 = por %p62, %p63
      %p66 = scmp.ne.s32.totalorder %s49, %s65
      %p67 = scmp.eq.s32.totalorder %s29, 0
      %p68 = por %p66, %p67
      %s70 = sadd.s32 %s69, 1
      %p73 = scmp.eq.s32.totalorder %s23, 3
      %p74 = scmp.ne.s32.totalorder %s69, %s71
      %p75 = scmp.eq.s32.totalorder %s23, 0
      %p76 = por %p74, %p75
      %p77 = scmp.ne.s32.totalorder %s69, %s71
      %p78 = scmp.eq.s32.totalorder %s28, 3
      %p79 = por %p77, %p78
      %p80 = scmp.ne.s32.totalorder %s71, %s72
      %p81 = scmp.eq.s32.totalorder %s28, 0
      %p82 = por %p80, %p81
      %p83 = scmp.ne.s32.totalorder %s71, %s72
      %p84 = scmp.eq.s32.totalorder %s29, 3
      %p85 = por %p83, %p84
      %p87 = scmp.ne.s32.totalorder %s72, %s86
      %p88 = scmp.eq.s32.totalorder %s29, 0
      %p89 = por %p87, %p88
      %s91 = sadd.s32 %s90, 1
      %p94 = scmp.eq.s32.totalorder %s23, 3
      %p95 = scmp.ne.s32.totalorder %s90, %s92
      %p96 = scmp.eq.s32.totalorder %s23, 0
      %p97 = por %p95, %p96
      %p98 = scmp.ne.s32.totalorder %s90, %s92
      %p99 = scmp.eq.s32.totalorder %s28, 3
      %p100 = por %p98, %p99
      %p101 = scmp.ne.s32.totalorder %s92, %s93
      %p102 = scmp.eq.s32.totalorder %s28, 0
      %p103 = por %p101, %p102
      %p104 = scmp.ne.s32.totalorder %s92, %s93
      %p105 = scmp.eq.s32.totalorder %s29, 3
      %p106 = por %p104, %p105
      %p108 = scmp.ne.s32.totalorder %s93, %s107
      %p109 = scmp.eq.s32.totalorder %s29, 0
      %p110 = por %p108, %p109
      %s112 = sadd.s32 %s111, 1
      %p115 = scmp.eq.s32.totalorder %s23, 3
      %p116 = scmp.ne.s32.totalorder %s111, %s113
      %p117 = scmp.eq.s32.totalorder %s23, 0
      %p118 = por %p116, %p117
      %p119 = scmp.ne.s32.totalorder %s111, %s113
      %p120 = scmp.eq.s32.totalorder %s28, 3
      %p121 = por %p119, %p120
      %p122 = scmp.ne.s32.totalorder %s113, %s114
      %p123 = scmp.eq.s32.totalorder %s28, 0
      %p124 = por %p122, %p123
      %p125 = scmp.ne.s32.totalorder %s113, %s114
      %p126 = scmp.eq.s32.totalorder %s29, 3
      %p127 = por %p125, %p126
      %p129 = scmp.ne.s32.totalorder %s114, %s128
      %p130 = scmp.eq.s32.totalorder %s29, 0
      %p131 = por %p129, %p130
      %s133 = sadd.s32 %s132, 1
      %p136 = scmp.eq.s32.totalorder %s23, 3
      %p137 = scmp.ne.s32.totalorder %s132, %s134
      %p138 = scmp.eq.s32.totalorder %s23, 0
      %p139 = por %p137, %p138
      %p140 = scmp.ne.s32.totalorder %s132, %s134
      %p141 = scmp.eq.s32.totalorder %s28, 3
      %p142 = por %p140, %p141
      %p143 = scmp.ne.s32.totalorder %s134, %s135
      %p144 = scmp.eq.s32.totalorder %s28, 0
      %p145 = por %p143, %p144
      %p146 = scmp.ne.s32.totalorder %s134, %s135
      %p147 = scmp.eq.s32.totalorder %s29, 3
      %p148 = por %p146, %p147
      %p150 = scmp.ne.s32.totalorder %s135, %s149
      %p151 = scmp.eq.s32.totalorder %s29, 0
      %p152 = por %p150, %p151
      %s154 = sadd.s32 %s153, 1
      %p157 = scmp.eq.s32.totalorder %s23, 3
      %p158 = scmp.ne.s32.totalorder %s153, %s155
      %p159 = scmp.eq.s32.totalorder %s23, 0
      %p160 = por %p158, %p159
      %p161 = scmp.ne.s32.totalorder %s153, %s155
      %p162 = scmp.eq.s32.totalorder %s28, 3
      %p163 = por %p161, %p162
      %p164 = scmp.ne.s32.totalorder %s155, %s156
      %p165 = scmp.eq.s32.totalorder %s28, 0
      %p166 = por %p164, %p165
      %p167 = scmp.ne.s32.totalorder %s155, %s156
      %p168 = scmp.eq.s32.totalorder %s29, 3
      %p169 = por %p167, %p168
      %p171 = scmp.ne.s32.totalorder %s156, %s170
      %p172 = scmp.eq.s32.totalorder %s29, 0
      %p173 = por %p171, %p172
      %s175 = sadd.s32 %s174, 1
      %p178 = scmp.eq.s32.totalorder %s23, 3
      %p179 = scmp.ne.s32.totalorder %s174, %s176
      %p180 = scmp.eq.s32.totalorder %s23, 0
      %p181 = por %p179, %p180
      %p182 = scmp.ne.s32.totalorder %s174, %s176
      %p183 = scmp.eq.s32.totalorder %s28, 3
      %p184 = por %p182, %p183
      %p185 = scmp.ne.s32.totalorder %s176, %s177
      %p186 = scmp.eq.s32.totalorder %s28, 0
      %p187 = por %p185, %p186
      %p188 = scmp.ne.s32.totalorder %s176, %s177
      %p189 = scmp.eq.s32.totalorder %s29, 3
      %p190 = por %p188, %p189
      %p192 = scmp.ne.s32.totalorder %s177, %s191
      %p193 = scmp.eq.s32.totalorder %s29, 0
      %p194 = por %p192, %p193
      %s196 = sadd.s32 %s195, 1
      %p199 = scmp.eq.s32.totalorder %s23, 3
      %p200 = scmp.ne.s32.totalorder %s195, %s197
      %p201 = scmp.eq.s32.totalorder %s23, 0
      %p202 = por %p200, %p201
      %p203 = scmp.ne.s32.totalorder %s195, %s197
      %p204 = scmp.eq.s32.totalorder %s28, 3
      %p205 = por %p203, %p204
      %p206 = scmp.ne.s32.totalorder %s197, %s198
      %p207 = scmp.eq.s32.totalorder %s28, 0
      %p208 = por %p206, %p207
      %p209 = scmp.ne.s32.totalorder %s197, %s198
      %p210 = scmp.eq.s32.totalorder %s29, 3
      %p211 = por %p209, %p210
      %p213 = scmp.ne.s32.totalorder %s198, %s212
      %p214 = scmp.eq.s32.totalorder %s29, 0
      %p215 = por %p213, %p214
      %s216 = ssub.s32 %s30, %s42
      %s217 = ssub.s32 %s31, %s38
      %s218 = sor.u32 %s216, %s217
      %p219 = scmp.eq.s32.totalorder %s218, 0
      %s221 = sadd.s32 %s220, 1
      %s222 = scalar_select %p219, %s220, %s221
      %p225 = pneg %p219
      %p226 = scmp.eq.s32.totalorder %s23, 3
      %p227 = por %p225, %p226
      %p228 = scmp.ne.s32.totalorder %s220, %s223
      %p229 = scmp.eq.s32.totalorder %s23, 0
      %p230 = por %p228, %p229
      %p231 = scmp.ne.s32.totalorder %s220, %s223
      %p232 = scmp.eq.s32.totalorder %s28, 3
      %p233 = por %p231, %p232
      %p234 = scmp.ne.s32.totalorder %s223, %s224
      %p235 = scmp.eq.s32.totalorder %s28, 0
      %p236 = por %p234, %p235
      %p237 = scmp.ne.s32.totalorder %s223, %s224
      %p238 = scmp.eq.s32.totalorder %s29, 3
      %p239 = por %p237, %p238
      %p241 = scmp.ne.s32.totalorder %s224, %s240
      %p242 = scmp.eq.s32.totalorder %s29, 0
      %p243 = por %p241, %p242
      %p244 = scmp.le.s32.totalorder 1, %s23
      %p245 = scmp.lt.s32.totalorder %s23, 5
      %p246 = pnand %p244, %p245
      %p247 = pneg %p246
      // Predicated region
      $region9: #{tpu_custom_call.1} parent=5 // pred_check
        _
      $region10: #{tpu_custom_call.1} parent=5 // pred_check_branch
        %249 = sbr.rel (%p246) target = $region12
      $region11: #{tpu_custom_call.1} parent=5 // pred_region
        %s250 = ssub.s32 %s23, 1
        // Predicated region
        $region13: #{tpu_custom_call.1} parent=11 // pred_check
          %p251 = pneg %p82
        $region14: #{tpu_custom_call.1} parent=11 // pred_check_branch
          %253 = sbr.rel (%p251) target = $region16
        $region15: #{tpu_custom_call.1} parent=11 // pred_region
          %s255 = ssub.s32 2048, 2048
          %256 = vsyncadd [#allocation9], %s255
          %s257 = sshll.u32 [#allocation8], 4
          %s258 = int_to_ptr.vmem [resolvable:$true] %s257
          %263 = dma.hbm_to_vmem [thread:$0]  %s1, 2048, %s258, [#allocation9], 128, 128, 8
        $region16: #{tpu_custom_call.1} parent=11 // pred_fallthru
          _
        // Predicated region
        $region17: #{tpu_custom_call.1} parent=11 // pred_check
          %p264 = pneg %p103
        $region18: #{tpu_custom_call.1} parent=11 // pred_check_branch
          %266 = sbr.rel (%p264) target = $region20
        $region19: #{tpu_custom_call.1} parent=11 // pred_region
          _
        $region20: #{tpu_custom_call.1} parent=11 // pred_fallthru
          _
        // Predicated region
        $region21: #{tpu_custom_call.1} parent=11 // pred_check
          %p267 = pneg %p124
        $region22: #{tpu_custom_call.1} parent=11 // pred_check_branch
          %269 = sbr.rel (%p267) target = $region24
        $region23: #{tpu_custom_call.1} parent=11 // pred_region
          %s271 = ssub.s32 2048, 2048
          %272 = vsyncadd [#allocation9], %s271
          %s273 = sshll.u32 [#allocation10], 4
          %s274 = int_to_ptr.vmem [resolvable:$true] %s273
          %279 = dma.hbm_to_vmem [thread:$0]  %s3, 2048, %s274, [#allocation9], 128, 128, 8
        $region24: #{tpu_custom_call.1} parent=11 // pred_fallthru
          _
        // Predicated region
        $region25: #{tpu_custom_call.1} parent=11 // pred_check
          %p280 = pneg %p145
        $region26: #{tpu_custom_call.1} parent=11 // pred_check_branch
          %282 = sbr.rel (%p280) target = $region28
        $region27: #{tpu_custom_call.1} parent=11 // pred_region
          _
        $region28: #{tpu_custom_call.1} parent=11 // pred_fallthru
          _
        // Predicated region
        $region29: #{tpu_custom_call.1} parent=11 // pred_check
          %p283 = pneg %p166
        $region30: #{tpu_custom_call.1} parent=11 // pred_check_branch
          %285 = sbr.rel (%p283) target = $region32
        $region31: #{tpu_custom_call.1} parent=11 // pred_region
          %s287 = ssub.s32 2048, 2048
          %288 = vsyncadd [#allocation12], %s287
          %s289 = sshll.u32 [#allocation11], 4
          %s290 = int_to_ptr.vmem [resolvable:$true] %s289
          %295 = dma.hbm_to_vmem [thread:$0]  %s5, 2048, %s290, [#allocation12], 128, 128, 8
        $region32: #{tpu_custom_call.1} parent=11 // pred_fallthru
          _
        // Predicated region
        $region33: #{tpu_custom_call.1} parent=11 // pred_check
          %p296 = pneg %p187
        $region34: #{tpu_custom_call.1} parent=11 // pred_check_branch
          %298 = sbr.rel (%p296) target = $region36
        $region35: #{tpu_custom_call.1} parent=11 // pred_region
          _
        $region36: #{tpu_custom_call.1} parent=11 // pred_fallthru
          _
        // Predicated region
        $region37: #{tpu_custom_call.1} parent=11 // pred_check
          %p299 = pneg %p208
        $region38: #{tpu_custom_call.1} parent=11 // pred_check_branch
          %301 = sbr.rel (%p299) target = $region40
        $region39: #{tpu_custom_call.1} parent=11 // pred_region
          _
        $region40: #{tpu_custom_call.1} parent=11 // pred_fallthru
          _
      $region12: #{tpu_custom_call.1} parent=5 // pred_fallthru
        _
      %p302 = scmp.lt.s32.totalorder %s23, 4
      // Predicated region
      $region41: #{tpu_custom_call.1} parent=5 // pred_check
        %p303 = pneg %p302
      $region42: #{tpu_custom_call.1} parent=5 // pred_check_branch
        %305 = sbr.rel (%p303) target = $region44
      $region43: #{tpu_custom_call.1} parent=5 // pred_region
        // Predicated region
        $region45: #{tpu_custom_call.1} parent=43 // pred_check
          %p306 = pneg %p55
        $region46: #{tpu_custom_call.1} parent=43 // pred_check_branch
          %308 = sbr.rel (%p306) target = $region48
        $region47: #{tpu_custom_call.1} parent=43 // pred_region
          %s309 = sand.u32 %s45, 1
          %s310 = scalar_lea.sflag [#allocation6], %s309
          %s311 = sand.u32 %s45, 1
          %s312 = smul.addr %s311, 256
          %s313 = scalar_lea.vmem [#allocation5], %s312
          %s315 = ssub.s32 4096, 4096
          %316 = vsyncadd %s310, %s315
          %s317 = smul.addr %s30, 32
          %s318 = smul.addr %s317, 128
          %s319 = scalar_lea.hbm %s0, %s318
          %s320 = sshll.u32 %s313, 4
          %s321 = int_to_ptr.vmem [resolvable:$true] %s320
          %326 = dma.hbm_to_vmem [thread:$0]  %s319, 4096, %s321, %s310, 128, 128, 8
        $region48: #{tpu_custom_call.1} parent=43 // pred_fallthru
          _
      $region44: #{tpu_custom_call.1} parent=5 // pred_fallthru
        _
      %p327 = scmp.le.s32.totalorder 1, %s23
      %p328 = scmp.lt.s32.totalorder %s23, 5
      %p329 = pnand %p327, %p328
      %p330 = pneg %p329
      // Predicated region
      $region49: #{tpu_custom_call.1} parent=5 // pred_check
        _
      $region50: #{tpu_custom_call.1} parent=5 // pred_check_branch
        %332 = sbr.rel (%p329) target = $region52
      $region51: #{tpu_custom_call.1} parent=5 // pred_region
        %s333 = ssub.s32 %s23, 1
        %s334 = sand.u32 %s48, 1
        %s335 = scalar_lea.sflag [#allocation6], %s334
        %s336 = sand.u32 %s48, 1
        %s337 = smul.addr %s336, 256
        %s338 = scalar_lea.vmem [#allocation5], %s337
        // Predicated region
        $region53: #{tpu_custom_call.1} parent=51 // pred_check
          %p339 = pneg %p61
        $region54: #{tpu_custom_call.1} parent=51 // pred_check_branch
          %341 = sbr.rel (%p339) target = $region56
        $region55: #{tpu_custom_call.1} parent=51 // pred_region
          %342 = dma.done %s335, 4096
        $region56: #{tpu_custom_call.1} parent=51 // pred_fallthru
          _
        // Predicated region
        $region57: #{tpu_custom_call.1} parent=51 // pred_check
          %p343 = pneg %p82
        $region58: #{tpu_custom_call.1} parent=51 // pred_check_branch
          %345 = sbr.rel (%p343) target = $region60
        $region59: #{tpu_custom_call.1} parent=51 // pred_region
          %346 = dma.done [#allocation9], 2048
        $region60: #{tpu_custom_call.1} parent=51 // pred_fallthru
          _
        // Predicated region
        $region61: #{tpu_custom_call.1} parent=51 // pred_check
          %p347 = pneg %p124
        $region62: #{tpu_custom_call.1} parent=51 // pred_check_branch
          %349 = sbr.rel (%p347) target = $region64
        $region63: #{tpu_custom_call.1} parent=51 // pred_region
          %350 = dma.done [#allocation9], 2048
        $region64: #{tpu_custom_call.1} parent=51 // pred_fallthru
          _
        // Predicated region
        $region65: #{tpu_custom_call.1} parent=51 // pred_check
          %p351 = pneg %p166
        $region66: #{tpu_custom_call.1} parent=51 // pred_check_branch
          %353 = sbr.rel (%p351) target = $region68
        $region67: #{tpu_custom_call.1} parent=51 // pred_region
          %354 = dma.done [#allocation12], 2048
        $region68: #{tpu_custom_call.1} parent=51 // pred_fallthru
          _
        %s355 = sand.u32 %s48, 1
        %s356 = scalar_lea.sflag [#allocation6], %s355
        %s357 = sand.u32 %s48, 1
        %s358 = smul.addr %s357, 256
        %s359 = scalar_lea.vmem [#allocation5], %s358
        %p360 = pneg %p61
        %p361 = pneg %p58
        %p362 = pneg %p82
        %p363 = pneg %p79
        %p364 = pneg %p103
        %p365 = pneg %p100
        %p366 = pneg %p124
        %p367 = pneg %p121
        %p368 = pneg %p145
        %p369 = pneg %p142
        %p370 = pneg %p166
        %p371 = pneg %p163
        %p372 = pneg %p187
        %p373 = pneg %p184
        %p374 = pneg %p208
        %p375 = pneg %p205
        %p376 = pneg %p236
        %p377 = pneg %p233
        %s378 = sand.u32 %s223, 1
        %s379 = scalar_lea.sflag [#allocation7], %s378
        %s380 = sand.u32 %s223, 1
        %s381 = smul.addr %s380, 128
        %s382 = scalar_lea.vmem [#allocation13], %s381
        %s383 = smul.u32 16, %s33
        %p384 = scmp.eq.s32.totalorder %s33, 0
        // Predicated region
        $region69: #{tpu_custom_call.1} parent=51 // pred_check
          %p385 = pneg %p384
        $region70: #{tpu_custom_call.1} parent=51 // pred_check_branch
          %387 = sbr.rel (%p385) target = $region72
        $region71: #{tpu_custom_call.1} parent=51 // pred_region
          %v388 = vld [vmem:[%s338] sm:$0xff]
          %v389 = vld [vmem:[%s338 + $0x8] sm:$0xff]
          %v390 = vld [vmem:[%s338 + $0x10] sm:$0xff]
          %v391 = vld [vmem:[%s338 + $0x18] sm:$0xff]
          %v392 = vld [vmem:[%s338 + $0x20] sm:$0xff]
          %v393 = vld [vmem:[%s338 + $0x28] sm:$0xff]
          %v394 = vld [vmem:[%s338 + $0x30] sm:$0xff]
          %v395 = vld [vmem:[%s338 + $0x38] sm:$0xff]
          %v396 = vld [vmem:[%s338 + $0x40] sm:$0xff]
          %v397 = vld [vmem:[%s338 + $0x48] sm:$0xff]
          %v398 = vld [vmem:[%s338 + $0x50] sm:$0xff]
          %v399 = vld [vmem:[%s338 + $0x58] sm:$0xff]
          %v400 = vld [vmem:[%s338 + $0x60] sm:$0xff]
          %v401 = vld [vmem:[%s338 + $0x68] sm:$0xff]
          %v402 = vld [vmem:[%s338 + $0x70] sm:$0xff]
          %v403 = vld [vmem:[%s338 + $0x78] sm:$0xff]
          %v404 = vld [vmem:[%s338 + $0x80] sm:$0xff]
          %v405 = vld [vmem:[%s338 + $0x88] sm:$0xff]
          %v406 = vld [vmem:[%s338 + $0x90] sm:$0xff]
          %v407 = vld [vmem:[%s338 + $0x98] sm:$0xff]
          %v408 = vld [vmem:[%s338 + $0xa0] sm:$0xff]
          %v409 = vld [vmem:[%s338 + $0xa8] sm:$0xff]
          %v410 = vld [vmem:[%s338 + $0xb0] sm:$0xff]
          %v411 = vld [vmem:[%s338 + $0xb8] sm:$0xff]
          %v412 = vld [vmem:[%s338 + $0xc0] sm:$0xff]
          %v413 = vld [vmem:[%s338 + $0xc8] sm:$0xff]
          %v414 = vld [vmem:[%s338 + $0xd0] sm:$0xff]
          %v415 = vld [vmem:[%s338 + $0xd8] sm:$0xff]
          %v416 = vld [vmem:[%s338 + $0xe0] sm:$0xff]
          %v417 = vld [vmem:[%s338 + $0xe8] sm:$0xff]
          %v418 = vld [vmem:[%s338 + $0xf0] sm:$0xff]
          %v419 = vld [vmem:[%s338 + $0xf8] sm:$0xff]
          %v420 = vld [vmem:[#allocation10] sm:$0xff]
          %v421 = vld [vmem:[#allocation10 + $0x8] sm:$0xff]
          %v422 = vld [vmem:[#allocation10 + $0x10] sm:$0xff]
          %v423 = vld [vmem:[#allocation10 + $0x18] sm:$0xff]
          %v424 = vld [vmem:[#allocation10 + $0x20] sm:$0xff]
          %v425 = vld [vmem:[#allocation10 + $0x28] sm:$0xff]
          %v426 = vld [vmem:[#allocation10 + $0x30] sm:$0xff]
          %v427 = vld [vmem:[#allocation10 + $0x38] sm:$0xff]
          %v428 = vld [vmem:[#allocation10 + $0x40] sm:$0xff]
          %v429 = vld [vmem:[#allocation10 + $0x48] sm:$0xff]
          %v430 = vld [vmem:[#allocation10 + $0x50] sm:$0xff]
          %v431 = vld [vmem:[#allocation10 + $0x58] sm:$0xff]
          %v432 = vld [vmem:[#allocation10 + $0x60] sm:$0xff]
          %v433 = vld [vmem:[#allocation10 + $0x68] sm:$0xff]
          %v434 = vld [vmem:[#allocation10 + $0x70] sm:$0xff]
          %v435 = vld [vmem:[#allocation10 + $0x78] sm:$0xff]
          %v436 = vld [vmem:[%s4] sm:$0x1]
          %v438 = vlaneseq
          %v439 = vshrl.u32 %v438, 7
          %v440 = vsub.s32 0, %v439
          %v441 = vrot.slane %v436, %v440
          %443 = vmatprep.subr.mxu0 0.0
          %444 = vmatpush1.msra.mxu0 %v435
          %445 = vmatprep.subr.mxu0 0.0
          %446 = vmatpush1.msra.mxu0 %v434
          %447 = vmatprep.subr.mxu0 0.0
          %448 = vmatpush1.msra.mxu0 %v433
          %449 = vmatprep.subr.mxu0 0.0
          %450 = vmatpush1.msra.mxu0 %v432
          %451 = vmatprep.subr.mxu0 0.0
          %452 = vmatpush1.msra.mxu0 %v431
          %453 = vmatprep.subr.mxu0 0.0
          %454 = vmatpush1.msra.mxu0 %v430
          %455 = vmatprep.subr.mxu0 0.0
          %456 = vmatpush1.msra.mxu0 %v429
          %457 = vmatprep.subr.mxu0 0.0
          %458 = vmatpush1.msra.mxu0 %v428
          %459 = vmatprep.subr.mxu0 0.0
          %460 = vmatpush1.msra.mxu0 %v427
          %461 = vmatprep.subr.mxu0 0.0
          %462 = vmatpush1.msra.mxu0 %v426
          %463 = vmatprep.subr.mxu0 0.0
          %464 = vmatpush1.msra.mxu0 %v425
          %465 = vmatprep.subr.mxu0 0.0
          %466 = vmatpush1.msra.mxu0 %v424
          %467 = vmatprep.subr.mxu0 0.0
          %468 = vmatpush1.msra.mxu0 %v423
          %469 = vmatprep.subr.mxu0 0.0
          %470 = vmatpush1.msra.mxu0 %v422
          %471 = vmatprep.subr.mxu0 0.0
          %472 = vmatpush1.msra.mxu0 %v421
          %473 = vmatprep.subr.mxu0 0.0
          %474 = vmatpush1.msra.mxu0 %v420
          %475 = vmatprep.subr.mxu0 0.0
          %476 = vmatpush2.msra.mxu0 0.0
          %477 = vmatprep.subr.mxu0 0.0
          %478 = vmatpush2.msra.mxu0 0.0
          %479 = vmatprep.subr.mxu0 0.0
          %480 = vmatpush2.msra.mxu0 0.0
          %481 = vmatprep.subr.mxu0 0.0
          %482 = vmatpush2.msra.mxu0 0.0
          %483 = vmatprep.subr.mxu0 0.0
          %484 = vmatpush2.msra.mxu0 0.0
          %485 = vmatprep.subr.mxu0 0.0
          %486 = vmatpush2.msra.mxu0 0.0
          %487 = vmatprep.subr.mxu0 0.0
          %488 = vmatpush2.msra.mxu0 0.0
          %489 = vmatprep.subr.mxu0 0.0
          %490 = vmatpush2.msra.mxu0 0.0
          %491 = vmatprep.subr.mxu0 0.0
          %492 = vmatpush2.msra.mxu0 0.0
          %493 = vmatprep.subr.mxu0 0.0
          %494 = vmatpush2.msra.mxu0 0.0
          %495 = vmatprep.subr.mxu0 0.0
          %496 = vmatpush2.msra.mxu0 0.0
          %497 = vmatprep.subr.mxu0 0.0
          %498 = vmatpush2.msra.mxu0 0.0
          %499 = vmatprep.subr.mxu0 0.0
          %500 = vmatpush2.msra.mxu0 0.0
          %501 = vmatprep.subr.mxu0 0.0
          %502 = vmatpush2.msra.mxu0 0.0
          %503 = vmatprep.subr.mxu0 0.0
          %504 = vmatpush2.msra.mxu0 0.0
          %505 = vmatprep.subr.mxu0 0.0
          %506 = vmatpush2.msra.mxu0 0.0
          %507 = vmatprep.mubr.f32.mxu0 0.0
          %508 = vmatmul.mubr.f32.gmra.mxu0 %v388
          %v509 = vpop.f32.mrf.mxu0
          %v510 = vadd.f32 %v441, %v509
          %v511 = vpop.f32.mrf.mxu0
          %512 = vmatprep.mubr.f32.mxu0 0.0
          %513 = vmatmul.mubr.f32.gmra.mxu0 %v389
          %v514 = vpop.f32.mrf.mxu0
          %v515 = vadd.f32 %v441, %v514
          %v516 = vpop.f32.mrf.mxu0
          %517 = vmatprep.mubr.f32.mxu0 0.0
          %518 = vmatmul.mubr.f32.gmra.mxu0 %v390
          %v519 = vpop.f32.mrf.mxu0
          %v520 = vadd.f32 %v441, %v519
          %v521 = vpop.f32.mrf.mxu0
          %522 = vmatprep.mubr.f32.mxu0 0.0
          %523 = vmatmul.mubr.f32.gmra.mxu0 %v391
          %v524 = vpop.f32.mrf.mxu0
          %v525 = vadd.f32 %v441, %v524
          %v526 = vpop.f32.mrf.mxu0
          %527 = vmatprep.mubr.f32.mxu0 0.0
          %528 = vmatmul.mubr.f32.gmra.mxu0 %v392
          %v529 = vpop.f32.mrf.mxu0
          %v530 = vadd.f32 %v441, %v529
          %v531 = vpop.f32.mrf.mxu0
          %532 = vmatprep.mubr.f32.mxu0 0.0
          %533 = vmatmul.mubr.f32.gmra.mxu0 %v393
          %v534 = vpop.f32.mrf.mxu0
          %v535 = vadd.f32 %v441, %v534
          %v536 = vpop.f32.mrf.mxu0
          %537 = vmatprep.mubr.f32.mxu0 0.0
          %538 = vmatmul.mubr.f32.gmra.mxu0 %v394
          %v539 = vpop.f32.mrf.mxu0
          %v540 = vadd.f32 %v441, %v539
          %v541 = vpop.f32.mrf.mxu0
          %542 = vmatprep.mubr.f32.mxu0 0.0
          %543 = vmatmul.mubr.f32.gmra.mxu0 %v395
          %v544 = vpop.f32.mrf.mxu0
          %v545 = vadd.f32 %v441, %v544
          %v546 = vpop.f32.mrf.mxu0
          %547 = vmatprep.mubr.f32.mxu0 0.0
          %548 = vmatmul.mubr.f32.gmra.mxu0 %v396
          %v549 = vpop.f32.mrf.mxu0
          %v550 = vadd.f32 %v441, %v549
          %v551 = vpop.f32.mrf.mxu0
          %552 = vmatprep.mubr.f32.mxu0 0.0
          %553 = vmatmul.mubr.f32.gmra.mxu0 %v397
          %v554 = vpop.f32.mrf.mxu0
          %v555 = vadd.f32 %v441, %v554
          %v556 = vpop.f32.mrf.mxu0
          %557 = vmatprep.mubr.f32.mxu0 0.0
          %558 = vmatmul.mubr.f32.gmra.mxu0 %v398
          %v559 = vpop.f32.mrf.mxu0
          %v560 = vadd.f32 %v441, %v559
          %v561 = vpop.f32.mrf.mxu0
          %562 = vmatprep.mubr.f32.mxu0 0.0
          %563 = vmatmul.mubr.f32.gmra.mxu0 %v399
          %v564 = vpop.f32.mrf.mxu0
          %v565 = vadd.f32 %v441, %v564
          %v566 = vpop.f32.mrf.mxu0
          %567 = vmatprep.mubr.f32.mxu0 0.0
          %568 = vmatmul.mubr.f32.gmra.mxu0 %v400
          %v569 = vpop.f32.mrf.mxu0
          %v570 = vadd.f32 %v441, %v569
          %v571 = vpop.f32.mrf.mxu0
          %572 = vmatprep.mubr.f32.mxu0 0.0
          %573 = vmatmul.mubr.f32.gmra.mxu0 %v401
          %v574 = vpop.f32.mrf.mxu0
          %v575 = vadd.f32 %v441, %v574
          %v576 = vpop.f32.mrf.mxu0
          %577 = vmatprep.mubr.f32.mxu0 0.0
          %578 = vmatmul.mubr.f32.gmra.mxu0 %v402
          %v579 = vpop.f32.mrf.mxu0
          %v580 = vadd.f32 %v441, %v579
          %v581 = vpop.f32.mrf.mxu0
          %582 = vmatprep.mubr.f32.mxu0 0.0
          %583 = vmatmul.mubr.f32.gmra.mxu0 %v403
          %v584 = vpop.f32.mrf.mxu0
          %v585 = vadd.f32 %v441, %v584
          %v586 = vpop.f32.mrf.mxu0
          %587 = vmatprep.mubr.f32.mxu0 0.0
          %588 = vmatmul.mubr.f32.gmra.mxu0 %v404
          %v589 = vpop.f32.mrf.mxu0
          %v590 = vadd.f32 %v441, %v589
          %v591 = vpop.f32.mrf.mxu0
          %592 = vmatprep.mubr.f32.mxu0 0.0
          %593 = vmatmul.mubr.f32.gmra.mxu0 %v405
          %v594 = vpop.f32.mrf.mxu0
          %v595 = vadd.f32 %v441, %v594
          %v596 = vpop.f32.mrf.mxu0
          %597 = vmatprep.mubr.f32.mxu0 0.0
          %598 = vmatmul.mubr.f32.gmra.mxu0 %v406
          %v599 = vpop.f32.mrf.mxu0
          %v600 = vadd.f32 %v441, %v599
          %v601 = vpop.f32.mrf.mxu0
          %602 = vmatprep.mubr.f32.mxu0 0.0
          %603 = vmatmul.mubr.f32.gmra.mxu0 %v407
          %v604 = vpop.f32.mrf.mxu0
          %v605 = vadd.f32 %v441, %v604
          %v606 = vpop.f32.mrf.mxu0
          %607 = vmatprep.mubr.f32.mxu0 0.0
          %608 = vmatmul.mubr.f32.gmra.mxu0 %v408
          %v609 = vpop.f32.mrf.mxu0
          %v610 = vadd.f32 %v441, %v609
          %v611 = vpop.f32.mrf.mxu0
          %612 = vmatprep.mubr.f32.mxu0 0.0
          %613 = vmatmul.mubr.f32.gmra.mxu0 %v409
          %v614 = vpop.f32.mrf.mxu0
          %v615 = vadd.f32 %v441, %v614
          %v616 = vpop.f32.mrf.mxu0
          %617 = vmatprep.mubr.f32.mxu0 0.0
          %618 = vmatmul.mubr.f32.gmra.mxu0 %v410
          %v619 = vpop.f32.mrf.mxu0
          %v620 = vadd.f32 %v441, %v619
          %v621 = vpop.f32.mrf.mxu0
          %622 = vmatprep.mubr.f32.mxu0 0.0
          %623 = vmatmul.mubr.f32.gmra.mxu0 %v411
          %v624 = vpop.f32.mrf.mxu0
          %v625 = vadd.f32 %v441, %v624
          %v626 = vpop.f32.mrf.mxu0
          %627 = vmatprep.mubr.f32.mxu0 0.0
          %628 = vmatmul.mubr.f32.gmra.mxu0 %v412
          %v629 = vpop.f32.mrf.mxu0
          %v630 = vadd.f32 %v441, %v629
          %v631 = vpop.f32.mrf.mxu0
          %632 = vmatprep.mubr.f32.mxu0 0.0
          %633 = vmatmul.mubr.f32.gmra.mxu0 %v413
          %v634 = vpop.f32.mrf.mxu0
          %v635 = vadd.f32 %v441, %v634
          %v636 = vpop.f32.mrf.mxu0
          %637 = vmatprep.mubr.f32.mxu0 0.0
          %638 = vmatmul.mubr.f32.gmra.mxu0 %v414
          %v639 = vpop.f32.mrf.mxu0
          %v640 = vadd.f32 %v441, %v639
          %v641 = vpop.f32.mrf.mxu0
          %642 = vmatprep.mubr.f32.mxu0 0.0
          %643 = vmatmul.mubr.f32.gmra.mxu0 %v415
          %v644 = vpop.f32.mrf.mxu0
          %v645 = vadd.f32 %v441, %v644
          %v646 = vpop.f32.mrf.mxu0
          %647 = vmatprep.mubr.f32.mxu0 0.0
          %648 = vmatmul.mubr.f32.gmra.mxu0 %v416
          %v649 = vpop.f32.mrf.mxu0
          %v650 = vadd.f32 %v441, %v649
          %v651 = vpop.f32.mrf.mxu0
          %652 = vmatprep.mubr.f32.mxu0 0.0
          %653 = vmatmul.mubr.f32.gmra.mxu0 %v417
          %v654 = vpop.f32.mrf.mxu0
          %v655 = vadd.f32 %v441, %v654
          %v656 = vpop.f32.mrf.mxu0
          %657 = vmatprep.mubr.f32.mxu0 0.0
          %658 = vmatmul.mubr.f32.gmra.mxu0 %v418
          %v659 = vpop.f32.mrf.mxu0
          %v660 = vadd.f32 %v441, %v659
          %v661 = vpop.f32.mrf.mxu0
          %662 = vmatprep.mubr.f32.mxu0 0.0
          %663 = vmatmul.mubr.f32.gmra.mxu0 %v419
          %v664 = vpop.f32.mrf.mxu0
          %v665 = vadd.f32 %v441, %v664
          %v666 = vpop.f32.mrf.mxu0
          %667 = vdwg.mxu0
          %668 = vst [vmem:[#allocation2] sm:$0xff] %v510
          %669 = vst [vmem:[#allocation2 + $0x8] sm:$0xff] %v515
          %670 = vst [vmem:[#allocation2 + $0x10] sm:$0xff] %v520
          %671 = vst [vmem:[#allocation2 + $0x18] sm:$0xff] %v525
          %672 = vst [vmem:[#allocation2 + $0x20] sm:$0xff] %v530
          %673 = vst [vmem:[#allocation2 + $0x28] sm:$0xff] %v535
          %674 = vst [vmem:[#allocation2 + $0x30] sm:$0xff] %v540
          %675 = vst [vmem:[#allocation2 + $0x38] sm:$0xff] %v545
          %676 = vst [vmem:[#allocation2 + $0x40] sm:$0xff] %v550
          %677 = vst [vmem:[#allocation2 + $0x48] sm:$0xff] %v555
          %678 = vst [vmem:[#allocation2 + $0x50] sm:$0xff] %v560
          %679 = vst [vmem:[#allocation2 + $0x58] sm:$0xff] %v565
          %680 = vst [vmem:[#allocation2 + $0x60] sm:$0xff] %v570
          %681 = vst [vmem:[#allocation2 + $0x68] sm:$0xff] %v575
          %682 = vst [vmem:[#allocation2 + $0x70] sm:$0xff] %v580
          %683 = vst [vmem:[#allocation2 + $0x78] sm:$0xff] %v585
          %684 = vst [vmem:[#allocation2 + $0x80] sm:$0xff] %v590
          %685 = vst [vmem:[#allocation2 + $0x88] sm:$0xff] %v595
          %686 = vst [vmem:[#allocation2 + $0x90] sm:$0xff] %v600
          %687 = vst [vmem:[#allocation2 + $0x98] sm:$0xff] %v605
          %688 = vst [vmem:[#allocation2 + $0xa0] sm:$0xff] %v610
          %689 = vst [vmem:[#allocation2 + $0xa8] sm:$0xff] %v615
          %690 = vst [vmem:[#allocation2 + $0xb0] sm:$0xff] %v620
          %691 = vst [vmem:[#allocation2 + $0xb8] sm:$0xff] %v625
          %692 = vst [vmem:[#allocation2 + $0xc0] sm:$0xff] %v630
          %693 = vst [vmem:[#allocation2 + $0xc8] sm:$0xff] %v635
          %694 = vst [vmem:[#allocation2 + $0xd0] sm:$0xff] %v640
          %695 = vst [vmem:[#allocation2 + $0xd8] sm:$0xff] %v645
          %696 = vst [vmem:[#allocation2 + $0xe0] sm:$0xff] %v650
          %697 = vst [vmem:[#allocation2 + $0xe8] sm:$0xff] %v655
          %698 = vst [vmem:[#allocation2 + $0xf0] sm:$0xff] %v660
          %699 = vst [vmem:[#allocation2 + $0xf8] sm:$0xff] %v665
          %v700 = vld [vmem:[#allocation11] sm:$0xff]
          %v701 = vld [vmem:[#allocation11 + $0x8] sm:$0xff]
          %v702 = vld [vmem:[#allocation11 + $0x10] sm:$0xff]
          %v703 = vld [vmem:[#allocation11 + $0x18] sm:$0xff]
          %v704 = vld [vmem:[#allocation11 + $0x20] sm:$0xff]
          %v705 = vld [vmem:[#allocation11 + $0x28] sm:$0xff]
          %v706 = vld [vmem:[#allocation11 + $0x30] sm:$0xff]
          %v707 = vld [vmem:[#allocation11 + $0x38] sm:$0xff]
          %v708 = vld [vmem:[#allocation11 + $0x40] sm:$0xff]
          %v709 = vld [vmem:[#allocation11 + $0x48] sm:$0xff]
          %v710 = vld [vmem:[#allocation11 + $0x50] sm:$0xff]
          %v711 = vld [vmem:[#allocation11 + $0x58] sm:$0xff]
          %v712 = vld [vmem:[#allocation11 + $0x60] sm:$0xff]
          %v713 = vld [vmem:[#allocation11 + $0x68] sm:$0xff]
          %v714 = vld [vmem:[#allocation11 + $0x70] sm:$0xff]
          %v715 = vld [vmem:[#allocation11 + $0x78] sm:$0xff]
          %v716 = vld [vmem:[%s6] sm:$0x1]
          %v718 = vlaneseq
          %v719 = vshrl.u32 %v718, 7
          %v720 = vsub.s32 0, %v719
          %v721 = vrot.slane %v716, %v720
          %723 = vmatprep.subr.mxu0 0.0
          %724 = vmatpush1.msra.mxu0 %v715
          %725 = vmatprep.subr.mxu0 0.0
          %726 = vmatpush1.msra.mxu0 %v714
          %727 = vmatprep.subr.mxu0 0.0
          %728 = vmatpush1.msra.mxu0 %v713
          %729 = vmatprep.subr.mxu0 0.0
          %730 = vmatpush1.msra.mxu0 %v712
          %731 = vmatprep.subr.mxu0 0.0
          %732 = vmatpush1.msra.mxu0 %v711
          %733 = vmatprep.subr.mxu0 0.0
          %734 = vmatpush1.msra.mxu0 %v710
          %735 = vmatprep.subr.mxu0 0.0
          %736 = vmatpush1.msra.mxu0 %v709
          %737 = vmatprep.subr.mxu0 0.0
          %738 = vmatpush1.msra.mxu0 %v708
          %739 = vmatprep.subr.mxu0 0.0
          %740 = vmatpush1.msra.mxu0 %v707
          %741 = vmatprep.subr.mxu0 0.0
          %742 = vmatpush1.msra.mxu0 %v706
          %743 = vmatprep.subr.mxu0 0.0
          %744 = vmatpush1.msra.mxu0 %v705
          %745 = vmatprep.subr.mxu0 0.0
          %746 = vmatpush1.msra.mxu0 %v704
          %747 = vmatprep.subr.mxu0 0.0
          %748 = vmatpush1.msra.mxu0 %v703
          %749 = vmatprep.subr.mxu0 0.0
          %750 = vmatpush1.msra.mxu0 %v702
          %751 = vmatprep.subr.mxu0 0.0
          %752 = vmatpush1.msra.mxu0 %v701
          %753 = vmatprep.subr.mxu0 0.0
          %754 = vmatpush1.msra.mxu0 %v700
          %755 = vmatprep.subr.mxu0 0.0
          %756 = vmatpush2.msra.mxu0 0.0
          %757 = vmatprep.subr.mxu0 0.0
          %758 = vmatpush2.msra.mxu0 0.0
          %759 = vmatprep.subr.mxu0 0.0
          %760 = vmatpush2.msra.mxu0 0.0
          %761 = vmatprep.subr.mxu0 0.0
          %762 = vmatpush2.msra.mxu0 0.0
          %763 = vmatprep.subr.mxu0 0.0
          %764 = vmatpush2.msra.mxu0 0.0
          %765 = vmatprep.subr.mxu0 0.0
          %766 = vmatpush2.msra.mxu0 0.0
          %767 = vmatprep.subr.mxu0 0.0
          %768 = vmatpush2.msra.mxu0 0.0
          %769 = vmatprep.subr.mxu0 0.0
          %770 = vmatpush2.msra.mxu0 0.0
          %771 = vmatprep.subr.mxu0 0.0
          %772 = vmatpush2.msra.mxu0 0.0
          %773 = vmatprep.subr.mxu0 0.0
          %774 = vmatpush2.msra.mxu0 0.0
          %775 = vmatprep.subr.mxu0 0.0
          %776 = vmatpush2.msra.mxu0 0.0
          %777 = vmatprep.subr.mxu0 0.0
          %778 = vmatpush2.msra.mxu0 0.0
          %779 = vmatprep.subr.mxu0 0.0
          %780 = vmatpush2.msra.mxu0 0.0
          %781 = vmatprep.subr.mxu0 0.0
          %782 = vmatpush2.msra.mxu0 0.0
          %783 = vmatprep.subr.mxu0 0.0
          %784 = vmatpush2.msra.mxu0 0.0
          %785 = vmatprep.subr.mxu0 0.0
          %786 = vmatpush2.msra.mxu0 0.0
          %787 = vmatprep.mubr.f32.mxu0 0.0
          %788 = vmatmul.mubr.f32.gmra.mxu0 %v388
          %v789 = vpop.f32.mrf.mxu0
          %v790 = vadd.f32 %v721, %v789
          %v791 = vpop.f32.mrf.mxu0
          %792 = vmatprep.mubr.f32.mxu0 0.0
          %793 = vmatmul.mubr.f32.gmra.mxu0 %v389
          %v794 = vpop.f32.mrf.mxu0
          %v795 = vadd.f32 %v721, %v794
          %v796 = vpop.f32.mrf.mxu0
          %797 = vmatprep.mubr.f32.mxu0 0.0
          %798 = vmatmul.mubr.f32.gmra.mxu0 %v390
          %v799 = vpop.f32.mrf.mxu0
          %v800 = vadd.f32 %v721, %v799
          %v801 = vpop.f32.mrf.mxu0
          %802 = vmatprep.mubr.f32.mxu0 0.0
          %803 = vmatmul.mubr.f32.gmra.mxu0 %v391
          %v804 = vpop.f32.mrf.mxu0
          %v805 = vadd.f32 %v721, %v804
          %v806 = vpop.f32.mrf.mxu0
          %807 = vmatprep.mubr.f32.mxu0 0.0
          %808 = vmatmul.mubr.f32.gmra.mxu0 %v392
          %v809 = vpop.f32.mrf.mxu0
          %v810 = vadd.f32 %v721, %v809
          %v811 = vpop.f32.mrf.mxu0
          %812 = vmatprep.mubr.f32.mxu0 0.0
          %813 = vmatmul.mubr.f32.gmra.mxu0 %v393
          %v814 = vpop.f32.mrf.mxu0
          %v815 = vadd.f32 %v721, %v814
          %v816 = vpop.f32.mrf.mxu0
          %817 = vmatprep.mubr.f32.mxu0 0.0
          %818 = vmatmul.mubr.f32.gmra.mxu0 %v394
          %v819 = vpop.f32.mrf.mxu0
          %v820 = vadd.f32 %v721, %v819
          %v821 = vpop.f32.mrf.mxu0
          %822 = vmatprep.mubr.f32.mxu0 0.0
          %823 = vmatmul.mubr.f32.gmra.mxu0 %v395
          %v824 = vpop.f32.mrf.mxu0
          %v825 = vadd.f32 %v721, %v824
          %v826 = vpop.f32.mrf.mxu0
          %827 = vmatprep.mubr.f32.mxu0 0.0
          %828 = vmatmul.mubr.f32.gmra.mxu0 %v396
          %v829 = vpop.f32.mrf.mxu0
          %v830 = vadd.f32 %v721, %v829
          %v831 = vpop.f32.mrf.mxu0
          %832 = vmatprep.mubr.f32.mxu0 0.0
          %833 = vmatmul.mubr.f32.gmra.mxu0 %v397
          %v834 = vpop.f32.mrf.mxu0
          %v835 = vadd.f32 %v721, %v834
          %v836 = vpop.f32.mrf.mxu0
          %837 = vmatprep.mubr.f32.mxu0 0.0
          %838 = vmatmul.mubr.f32.gmra.mxu0 %v398
          %v839 = vpop.f32.mrf.mxu0
          %v840 = vadd.f32 %v721, %v839
          %v841 = vpop.f32.mrf.mxu0
          %842 = vmatprep.mubr.f32.mxu0 0.0
          %843 = vmatmul.mubr.f32.gmra.mxu0 %v399
          %v844 = vpop.f32.mrf.mxu0
          %v845 = vadd.f32 %v721, %v844
          %v846 = vpop.f32.mrf.mxu0
          %847 = vmatprep.mubr.f32.mxu0 0.0
          %848 = vmatmul.mubr.f32.gmra.mxu0 %v400
          %v849 = vpop.f32.mrf.mxu0
          %v850 = vadd.f32 %v721, %v849
          %v851 = vpop.f32.mrf.mxu0
          %852 = vmatprep.mubr.f32.mxu0 0.0
          %853 = vmatmul.mubr.f32.gmra.mxu0 %v401
          %v854 = vpop.f32.mrf.mxu0
          %v855 = vadd.f32 %v721, %v854
          %v856 = vpop.f32.mrf.mxu0
          %857 = vmatprep.mubr.f32.mxu0 0.0
          %858 = vmatmul.mubr.f32.gmra.mxu0 %v402
          %v859 = vpop.f32.mrf.mxu0
          %v860 = vadd.f32 %v721, %v859
          %v861 = vpop.f32.mrf.mxu0
          %862 = vmatprep.mubr.f32.mxu0 0.0
          %863 = vmatmul.mubr.f32.gmra.mxu0 %v403
          %v864 = vpop.f32.mrf.mxu0
          %v865 = vadd.f32 %v721, %v864
          %v866 = vpop.f32.mrf.mxu0
          %867 = vmatprep.mubr.f32.mxu0 0.0
          %868 = vmatmul.mubr.f32.gmra.mxu0 %v404
          %v869 = vpop.f32.mrf.mxu0
          %v870 = vadd.f32 %v721, %v869
          %v871 = vpop.f32.mrf.mxu0
          %872 = vmatprep.mubr.f32.mxu0 0.0
          %873 = vmatmul.mubr.f32.gmra.mxu0 %v405
          %v874 = vpop.f32.mrf.mxu0
          %v875 = vadd.f32 %v721, %v874
          %v876 = vpop.f32.mrf.mxu0
          %877 = vmatprep.mubr.f32.mxu0 0.0
          %878 = vmatmul.mubr.f32.gmra.mxu0 %v406
          %v879 = vpop.f32.mrf.mxu0
          %v880 = vadd.f32 %v721, %v879
          %v881 = vpop.f32.mrf.mxu0
          %882 = vmatprep.mubr.f32.mxu0 0.0
          %883 = vmatmul.mubr.f32.gmra.mxu0 %v407
          %v884 = vpop.f32.mrf.mxu0
          %v885 = vadd.f32 %v721, %v884
          %v886 = vpop.f32.mrf.mxu0
          %887 = vmatprep.mubr.f32.mxu0 0.0
          %888 = vmatmul.mubr.f32.gmra.mxu0 %v408
          %v889 = vpop.f32.mrf.mxu0
          %v890 = vadd.f32 %v721, %v889
          %v891 = vpop.f32.mrf.mxu0
          %892 = vmatprep.mubr.f32.mxu0 0.0
          %893 = vmatmul.mubr.f32.gmra.mxu0 %v409
          %v894 = vpop.f32.mrf.mxu0
          %v895 = vadd.f32 %v721, %v894
          %v896 = vpop.f32.mrf.mxu0
          %897 = vmatprep.mubr.f32.mxu0 0.0
          %898 = vmatmul.mubr.f32.gmra.mxu0 %v410
          %v899 = vpop.f32.mrf.mxu0
          %v900 = vadd.f32 %v721, %v899
          %v901 = vpop.f32.mrf.mxu0
          %902 = vmatprep.mubr.f32.mxu0 0.0
          %903 = vmatmul.mubr.f32.gmra.mxu0 %v411
          %v904 = vpop.f32.mrf.mxu0
          %v905 = vadd.f32 %v721, %v904
          %v906 = vpop.f32.mrf.mxu0
          %907 = vmatprep.mubr.f32.mxu0 0.0
          %908 = vmatmul.mubr.f32.gmra.mxu0 %v412
          %v909 = vpop.f32.mrf.mxu0
          %v910 = vadd.f32 %v721, %v909
          %v911 = vpop.f32.mrf.mxu0
          %912 = vmatprep.mubr.f32.mxu0 0.0
          %913 = vmatmul.mubr.f32.gmra.mxu0 %v413
          %v914 = vpop.f32.mrf.mxu0
          %v915 = vadd.f32 %v721, %v914
          %v916 = vpop.f32.mrf.mxu0
          %917 = vmatprep.mubr.f32.mxu0 0.0
          %918 = vmatmul.mubr.f32.gmra.mxu0 %v414
          %v919 = vpop.f32.mrf.mxu0
          %v920 = vadd.f32 %v721, %v919
          %v921 = vpop.f32.mrf.mxu0
          %922 = vmatprep.mubr.f32.mxu0 0.0
          %923 = vmatmul.mubr.f32.gmra.mxu0 %v415
          %v924 = vpop.f32.mrf.mxu0
          %v925 = vadd.f32 %v721, %v924
          %v926 = vpop.f32.mrf.mxu0
          %927 = vmatprep.mubr.f32.mxu0 0.0
          %928 = vmatmul.mubr.f32.gmra.mxu0 %v416
          %v929 = vpop.f32.mrf.mxu0
          %v930 = vadd.f32 %v721, %v929
          %v931 = vpop.f32.mrf.mxu0
          %932 = vmatprep.mubr.f32.mxu0 0.0
          %933 = vmatmul.mubr.f32.gmra.mxu0 %v417
          %v934 = vpop.f32.mrf.mxu0
          %v935 = vadd.f32 %v721, %v934
          %v936 = vpop.f32.mrf.mxu0
          %937 = vmatprep.mubr.f32.mxu0 0.0
          %938 = vmatmul.mubr.f32.gmra.mxu0 %v418
          %v939 = vpop.f32.mrf.mxu0
          %v940 = vadd.f32 %v721, %v939
          %v941 = vpop.f32.mrf.mxu0
          %942 = vmatprep.mubr.f32.mxu0 0.0
          %943 = vmatmul.mubr.f32.gmra.mxu0 %v419
          %v944 = vpop.f32.mrf.mxu0
          %v945 = vadd.f32 %v721, %v944
          %v946 = vpop.f32.mrf.mxu0
          %947 = vdwg.mxu0
          %948 = vst [vmem:[#allocation3] sm:$0xff] %v790
          %949 = vst [vmem:[#allocation3 + $0x8] sm:$0xff] %v795
          %950 = vst [vmem:[#allocation3 + $0x10] sm:$0xff] %v800
          %951 = vst [vmem:[#allocation3 + $0x18] sm:$0xff] %v805
          %952 = vst [vmem:[#allocation3 + $0x20] sm:$0xff] %v810
          %953 = vst [vmem:[#allocation3 + $0x28] sm:$0xff] %v815
          %954 = vst [vmem:[#allocation3 + $0x30] sm:$0xff] %v820
          %955 = vst [vmem:[#allocation3 + $0x38] sm:$0xff] %v825
          %956 = vst [vmem:[#allocation3 + $0x40] sm:$0xff] %v830
          %957 = vst [vmem:[#allocation3 + $0x48] sm:$0xff] %v835
          %958 = vst [vmem:[#allocation3 + $0x50] sm:$0xff] %v840
          %959 = vst [vmem:[#allocation3 + $0x58] sm:$0xff] %v845
          %960 = vst [vmem:[#allocation3 + $0x60] sm:$0xff] %v850
          %961 = vst [vmem:[#allocation3 + $0x68] sm:$0xff] %v855
          %962 = vst [vmem:[#allocation3 + $0x70] sm:$0xff] %v860
          %963 = vst [vmem:[#allocation3 + $0x78] sm:$0xff] %v865
          %964 = vst [vmem:[#allocation3 + $0x80] sm:$0xff] %v870
          %965 = vst [vmem:[#allocation3 + $0x88] sm:$0xff] %v875
          %966 = vst [vmem:[#allocation3 + $0x90] sm:$0xff] %v880
          %967 = vst [vmem:[#allocation3 + $0x98] sm:$0xff] %v885
          %968 = vst [vmem:[#allocation3 + $0xa0] sm:$0xff] %v890
          %969 = vst [vmem:[#allocation3 + $0xa8] sm:$0xff] %v895
          %970 = vst [vmem:[#allocation3 + $0xb0] sm:$0xff] %v900
          %971 = vst [vmem:[#allocation3 + $0xb8] sm:$0xff] %v905
          %972 = vst [vmem:[#allocation3 + $0xc0] sm:$0xff] %v910
          %973 = vst [vmem:[#allocation3 + $0xc8] sm:$0xff] %v915
          %974 = vst [vmem:[#allocation3 + $0xd0] sm:$0xff] %v920
          %975 = vst [vmem:[#allocation3 + $0xd8] sm:$0xff] %v925
          %976 = vst [vmem:[#allocation3 + $0xe0] sm:$0xff] %v930
          %977 = vst [vmem:[#allocation3 + $0xe8] sm:$0xff] %v935
          %978 = vst [vmem:[#allocation3 + $0xf0] sm:$0xff] %v940
          %979 = vst [vmem:[#allocation3 + $0xf8] sm:$0xff] %v945
        $region72: #{tpu_custom_call.1} parent=51 // pred_fallthru
          _
        %s980 = smul.u32 %s33, 128
        %s981 = scalar_lea.vmem %s338, %s980 [#allocation5]
        %v982 = vld [vmem:[%s981] sm:$0xff]
        %v983 = vld [vmem:[%s981 + $0x8] sm:$0xff]
        %v984 = vld [vmem:[%s981 + $0x10] sm:$0xff]
        %v985 = vld [vmem:[%s981 + $0x18] sm:$0xff]
        %v986 = vld [vmem:[%s981 + $0x20] sm:$0xff]
        %v987 = vld [vmem:[%s981 + $0x28] sm:$0xff]
        %v988 = vld [vmem:[%s981 + $0x30] sm:$0xff]
        %v989 = vld [vmem:[%s981 + $0x38] sm:$0xff]
        %v990 = vld [vmem:[%s981 + $0x40] sm:$0xff]
        %v991 = vld [vmem:[%s981 + $0x48] sm:$0xff]
        %v992 = vld [vmem:[%s981 + $0x50] sm:$0xff]
        %v993 = vld [vmem:[%s981 + $0x58] sm:$0xff]
        %v994 = vld [vmem:[%s981 + $0x60] sm:$0xff]
        %v995 = vld [vmem:[%s981 + $0x68] sm:$0xff]
        %v996 = vld [vmem:[%s981 + $0x70] sm:$0xff]
        %v997 = vld [vmem:[%s981 + $0x78] sm:$0xff]
        %v998 = vld [vmem:[#allocation8] sm:$0xff]
        %v999 = vld [vmem:[#allocation8 + $0x8] sm:$0xff]
        %v1000 = vld [vmem:[#allocation8 + $0x10] sm:$0xff]
        %v1001 = vld [vmem:[#allocation8 + $0x18] sm:$0xff]
        %v1002 = vld [vmem:[#allocation8 + $0x20] sm:$0xff]
        %v1003 = vld [vmem:[#allocation8 + $0x28] sm:$0xff]
        %v1004 = vld [vmem:[#allocation8 + $0x30] sm:$0xff]
        %v1005 = vld [vmem:[#allocation8 + $0x38] sm:$0xff]
        %v1006 = vld [vmem:[#allocation8 + $0x40] sm:$0xff]
        %v1007 = vld [vmem:[#allocation8 + $0x48] sm:$0xff]
        %v1008 = vld [vmem:[#allocation8 + $0x50] sm:$0xff]
        %v1009 = vld [vmem:[#allocation8 + $0x58] sm:$0xff]
        %v1010 = vld [vmem:[#allocation8 + $0x60] sm:$0xff]
        %v1011 = vld [vmem:[#allocation8 + $0x68] sm:$0xff]
        %v1012 = vld [vmem:[#allocation8 + $0x70] sm:$0xff]
        %v1013 = vld [vmem:[#allocation8 + $0x78] sm:$0xff]
        %v1014 = vld [vmem:[%s2] sm:$0x1]
        %v1016 = vlaneseq
        %v1017 = vshrl.u32 %v1016, 7
        %v1018 = vsub.s32 0, %v1017
        %v1019 = vrot.slane %v1014, %v1018
        %1021 = vmatprep.subr.mxu0 0.0
        %1022 = vmatpush1.msra.mxu0 %v1013
        %1023 = vmatprep.subr.mxu0 0.0
        %1024 = vmatpush1.msra.mxu0 %v1012
        %1025 = vmatprep.subr.mxu0 0.0
        %1026 = vmatpush1.msra.mxu0 %v1011
        %1027 = vmatprep.subr.mxu0 0.0
        %1028 = vmatpush1.msra.mxu0 %v1010
        %1029 = vmatprep.subr.mxu0 0.0
        %1030 = vmatpush1.msra.mxu0 %v1009
        %1031 = vmatprep.subr.mxu0 0.0
        %1032 = vmatpush1.msra.mxu0 %v1008
        %1033 = vmatprep.subr.mxu0 0.0
        %1034 = vmatpush1.msra.mxu0 %v1007
        %1035 = vmatprep.subr.mxu0 0.0
        %1036 = vmatpush1.msra.mxu0 %v1006
        %1037 = vmatprep.subr.mxu0 0.0
        %1038 = vmatpush1.msra.mxu0 %v1005
        %1039 = vmatprep.subr.mxu0 0.0
        %1040 = vmatpush1.msra.mxu0 %v1004
        %1041 = vmatprep.subr.mxu0 0.0
        %1042 = vmatpush1.msra.mxu0 %v1003
        %1043 = vmatprep.subr.mxu0 0.0
        %1044 = vmatpush1.msra.mxu0 %v1002
        %1045 = vmatprep.subr.mxu0 0.0
        %1046 = vmatpush1.msra.mxu0 %v1001
        %1047 = vmatprep.subr.mxu0 0.0
        %1048 = vmatpush1.msra.mxu0 %v1000
        %1049 = vmatprep.subr.mxu0 0.0
        %1050 = vmatpush1.msra.mxu0 %v999
        %1051 = vmatprep.subr.mxu0 0.0
        %1052 = vmatpush1.msra.mxu0 %v998
        %1053 = vmatprep.subr.mxu0 0.0
        %1054 = vmatpush2.msra.mxu0 0.0
        %1055 = vmatprep.subr.mxu0 0.0
        %1056 = vmatpush2.msra.mxu0 0.0
        %1057 = vmatprep.subr.mxu0 0.0
        %1058 = vmatpush2.msra.mxu0 0.0
        %1059 = vmatprep.subr.mxu0 0.0
        %1060 = vmatpush2.msra.mxu0 0.0
        %1061 = vmatprep.subr.mxu0 0.0
        %1062 = vmatpush2.msra.mxu0 0.0
        %1063 = vmatprep.subr.mxu0 0.0
        %1064 = vmatpush2.msra.mxu0 0.0
        %1065 = vmatprep.subr.mxu0 0.0
        %1066 = vmatpush2.msra.mxu0 0.0
        %1067 = vmatprep.subr.mxu0 0.0
        %1068 = vmatpush2.msra.mxu0 0.0
        %1069 = vmatprep.subr.mxu0 0.0
        %1070 = vmatpush2.msra.mxu0 0.0
        %1071 = vmatprep.subr.mxu0 0.0
        %1072 = vmatpush2.msra.mxu0 0.0
        %1073 = vmatprep.subr.mxu0 0.0
        %1074 = vmatpush2.msra.mxu0 0.0
        %1075 = vmatprep.subr.mxu0 0.0
        %1076 = vmatpush2.msra.mxu0 0.0
        %1077 = vmatprep.subr.mxu0 0.0
        %1078 = vmatpush2.msra.mxu0 0.0
        %1079 = vmatprep.subr.mxu0 0.0
        %1080 = vmatpush2.msra.mxu0 0.0
        %1081 = vmatprep.subr.mxu0 0.0
        %1082 = vmatpush2.msra.mxu0 0.0
        %1083 = vmatprep.subr.mxu0 0.0
        %1084 = vmatpush2.msra.mxu0 0.0
        %1085 = vmatprep.mubr.f32.mxu0 0.0
        %1086 = vmatmul.mubr.f32.gmra.mxu0 %v982
        %v1087 = vpop.f32.mrf.mxu0
        %v1088 = vadd.f32 %v1019, %v1087
        %v1089 = vpop.f32.mrf.mxu0
        %1090 = vmatprep.mubr.f32.mxu0 0.0
        %1091 = vmatmul.mubr.f32.gmra.mxu0 %v983
        %v1092 = vpop.f32.mrf.mxu0
        %v1093 = vadd.f32 %v1019, %v1092
        %v1094 = vpop.f32.mrf.mxu0
        %1095 = vmatprep.mubr.f32.mxu0 0.0
        %1096 = vmatmul.mubr.f32.gmra.mxu0 %v984
        %v1097 = vpop.f32.mrf.mxu0
        %v1098 = vadd.f32 %v1019, %v1097
        %v1099 = vpop.f32.mrf.mxu0
        %1100 = vmatprep.mubr.f32.mxu0 0.0
        %1101 = vmatmul.mubr.f32.gmra.mxu0 %v985
        %v1102 = vpop.f32.mrf.mxu0
        %v1103 = vadd.f32 %v1019, %v1102
        %v1104 = vpop.f32.mrf.mxu0
        %1105 = vmatprep.mubr.f32.mxu0 0.0
        %1106 = vmatmul.mubr.f32.gmra.mxu0 %v986
        %v1107 = vpop.f32.mrf.mxu0
        %v1108 = vadd.f32 %v1019, %v1107
        %v1109 = vpop.f32.mrf.mxu0
        %1110 = vmatprep.mubr.f32.mxu0 0.0
        %1111 = vmatmul.mubr.f32.gmra.mxu0 %v987
        %v1112 = vpop.f32.mrf.mxu0
        %v1113 = vadd.f32 %v1019, %v1112
        %v1114 = vpop.f32.mrf.mxu0
        %1115 = vmatprep.mubr.f32.mxu0 0.0
        %1116 = vmatmul.mubr.f32.gmra.mxu0 %v988
        %v1117 = vpop.f32.mrf.mxu0
        %v1118 = vadd.f32 %v1019, %v1117
        %v1119 = vpop.f32.mrf.mxu0
        %1120 = vmatprep.mubr.f32.mxu0 0.0
        %1121 = vmatmul.mubr.f32.gmra.mxu0 %v989
        %v1122 = vpop.f32.mrf.mxu0
        %v1123 = vadd.f32 %v1019, %v1122
        %v1124 = vpop.f32.mrf.mxu0
        %1125 = vmatprep.mubr.f32.mxu0 0.0
        %1126 = vmatmul.mubr.f32.gmra.mxu0 %v990
        %v1127 = vpop.f32.mrf.mxu0
        %v1128 = vadd.f32 %v1019, %v1127
        %v1129 = vpop.f32.mrf.mxu0
        %1130 = vmatprep.mubr.f32.mxu0 0.0
        %1131 = vmatmul.mubr.f32.gmra.mxu0 %v991
        %v1132 = vpop.f32.mrf.mxu0
        %v1133 = vadd.f32 %v1019, %v1132
        %v1134 = vpop.f32.mrf.mxu0
        %1135 = vmatprep.mubr.f32.mxu0 0.0
        %1136 = vmatmul.mubr.f32.gmra.mxu0 %v992
        %v1137 = vpop.f32.mrf.mxu0
        %v1138 = vadd.f32 %v1019, %v1137
        %v1139 = vpop.f32.mrf.mxu0
        %1140 = vmatprep.mubr.f32.mxu0 0.0
        %1141 = vmatmul.mubr.f32.gmra.mxu0 %v993
        %v1142 = vpop.f32.mrf.mxu0
        %v1143 = vadd.f32 %v1019, %v1142
        %v1144 = vpop.f32.mrf.mxu0
        %1145 = vmatprep.mubr.f32.mxu0 0.0
        %1146 = vmatmul.mubr.f32.gmra.mxu0 %v994
        %v1147 = vpop.f32.mrf.mxu0
        %v1148 = vadd.f32 %v1019, %v1147
        %v1149 = vpop.f32.mrf.mxu0
        %1150 = vmatprep.mubr.f32.mxu0 0.0
        %1151 = vmatmul.mubr.f32.gmra.mxu0 %v995
        %v1152 = vpop.f32.mrf.mxu0
        %v1153 = vadd.f32 %v1019, %v1152
        %v1154 = vpop.f32.mrf.mxu0
        %1155 = vmatprep.mubr.f32.mxu0 0.0
        %1156 = vmatmul.mubr.f32.gmra.mxu0 %v996
        %v1157 = vpop.f32.mrf.mxu0
        %v1158 = vadd.f32 %v1019, %v1157
        %v1159 = vpop.f32.mrf.mxu0
        %1160 = vmatprep.mubr.f32.mxu0 0.0
        %1161 = vmatmul.mubr.f32.gmra.mxu0 %v997
        %v1162 = vpop.f32.mrf.mxu0
        %v1163 = vadd.f32 %v1019, %v1162
        %v1164 = vpop.f32.mrf.mxu0
        %1165 = vdwg.mxu0
        %v1166 = vld [vmem:[#allocation2] sm:$0xff]
        %v1167 = vld [vmem:[#allocation2 + $0x8] sm:$0xff]
        %v1168 = vld [vmem:[#allocation2 + $0x10] sm:$0xff]
        %v1169 = vld [vmem:[#allocation2 + $0x18] sm:$0xff]
        %v1170 = vld [vmem:[#allocation2 + $0x20] sm:$0xff]
        %v1171 = vld [vmem:[#allocation2 + $0x28] sm:$0xff]
        %v1172 = vld [vmem:[#allocation2 + $0x30] sm:$0xff]
        %v1173 = vld [vmem:[#allocation2 + $0x38] sm:$0xff]
        %v1174 = vld [vmem:[#allocation2 + $0x40] sm:$0xff]
        %v1175 = vld [vmem:[#allocation2 + $0x48] sm:$0xff]
        %v1176 = vld [vmem:[#allocation2 + $0x50] sm:$0xff]
        %v1177 = vld [vmem:[#allocation2 + $0x58] sm:$0xff]
        %v1178 = vld [vmem:[#allocation2 + $0x60] sm:$0xff]
        %v1179 = vld [vmem:[#allocation2 + $0x68] sm:$0xff]
        %v1180 = vld [vmem:[#allocation2 + $0x70] sm:$0xff]
        %v1181 = vld [vmem:[#allocation2 + $0x78] sm:$0xff]
        %v1182 = vld [vmem:[#allocation2 + $0x80] sm:$0xff]
        %v1183 = vld [vmem:[#allocation2 + $0x88] sm:$0xff]
        %v1184 = vld [vmem:[#allocation2 + $0x90] sm:$0xff]
        %v1185 = vld [vmem:[#allocation2 + $0x98] sm:$0xff]
        %v1186 = vld [vmem:[#allocation2 + $0xa0] sm:$0xff]
        %v1187 = vld [vmem:[#allocation2 + $0xa8] sm:$0xff]
        %v1188 = vld [vmem:[#allocation2 + $0xb0] sm:$0xff]
        %v1189 = vld [vmem:[#allocation2 + $0xb8] sm:$0xff]
        %v1190 = vld [vmem:[#allocation2 + $0xc0] sm:$0xff]
        %v1191 = vld [vmem:[#allocation2 + $0xc8] sm:$0xff]
        %v1192 = vld [vmem:[#allocation2 + $0xd0] sm:$0xff]
        %v1193 = vld [vmem:[#allocation2 + $0xd8] sm:$0xff]
        %v1194 = vld [vmem:[#allocation2 + $0xe0] sm:$0xff]
        %v1195 = vld [vmem:[#allocation2 + $0xe8] sm:$0xff]
        %v1196 = vld [vmem:[#allocation2 + $0xf0] sm:$0xff]
        %v1197 = vld [vmem:[#allocation2 + $0xf8] sm:$0xff]
        %1198 = vmatprep.subr.mxu0 0.0
        %1199 = vmatpush1.xpose.msra.mxu0 %v1181
        %1200 = vmatprep.subr.mxu0 0.0
        %1201 = vmatpush1.xpose.msra.mxu0 %v1180
        %1202 = vmatprep.subr.mxu0 0.0
        %1203 = vmatpush1.xpose.msra.mxu0 %v1179
        %1204 = vmatprep.subr.mxu0 0.0
        %1205 = vmatpush1.xpose.msra.mxu0 %v1178
        %1206 = vmatprep.subr.mxu0 0.0
        %1207 = vmatpush1.xpose.msra.mxu0 %v1177
        %1208 = vmatprep.subr.mxu0 0.0
        %1209 = vmatpush1.xpose.msra.mxu0 %v1176
        %1210 = vmatprep.subr.mxu0 0.0
        %1211 = vmatpush1.xpose.msra.mxu0 %v1175
        %1212 = vmatprep.subr.mxu0 0.0
        %1213 = vmatpush1.xpose.msra.mxu0 %v1174
        %1214 = vmatprep.subr.mxu0 0.0
        %1215 = vmatpush1.xpose.msra.mxu0 %v1173
        %1216 = vmatprep.subr.mxu0 0.0
        %1217 = vmatpush1.xpose.msra.mxu0 %v1172
        %1218 = vmatprep.subr.mxu0 0.0
        %1219 = vmatpush1.xpose.msra.mxu0 %v1171
        %1220 = vmatprep.subr.mxu0 0.0
        %1221 = vmatpush1.xpose.msra.mxu0 %v1170
        %1222 = vmatprep.subr.mxu0 0.0
        %1223 = vmatpush1.xpose.msra.mxu0 %v1169
        %1224 = vmatprep.subr.mxu0 0.0
        %1225 = vmatpush1.xpose.msra.mxu0 %v1168
        %1226 = vmatprep.subr.mxu0 0.0
        %1227 = vmatpush1.xpose.msra.mxu0 %v1167
        %1228 = vmatprep.subr.mxu0 0.0
        %1229 = vmatpush1.xpose.msra.mxu0 %v1166
        %1230 = vmatprep.subr.mxu0 0.0
        %1231 = vmatpush2.xpose.msra.mxu0 %v1197
        %1232 = vmatprep.subr.mxu0 0.0
        %1233 = vmatpush2.xpose.msra.mxu0 %v1196
        %1234 = vmatprep.subr.mxu0 0.0
        %1235 = vmatpush2.xpose.msra.mxu0 %v1195
        %1236 = vmatprep.subr.mxu0 0.0
        %1237 = vmatpush2.xpose.msra.mxu0 %v1194
        %1238 = vmatprep.subr.mxu0 0.0
        %1239 = vmatpush2.xpose.msra.mxu0 %v1193
        %1240 = vmatprep.subr.mxu0 0.0
        %1241 = vmatpush2.xpose.msra.mxu0 %v1192
        %1242 = vmatprep.subr.mxu0 0.0
        %1243 = vmatpush2.xpose.msra.mxu0 %v1191
        %1244 = vmatprep.subr.mxu0 0.0
        %1245 = vmatpush2.xpose.msra.mxu0 %v1190
        %1246 = vmatprep.subr.mxu0 0.0
        %1247 = vmatpush2.xpose.msra.mxu0 %v1189
        %1248 = vmatprep.subr.mxu0 0.0
        %1249 = vmatpush2.xpose.msra.mxu0 %v1188
        %1250 = vmatprep.subr.mxu0 0.0
        %1251 = vmatpush2.xpose.msra.mxu0 %v1187
        %1252 = vmatprep.subr.mxu0 0.0
        %1253 = vmatpush2.xpose.msra.mxu0 %v1186
        %1254 = vmatprep.subr.mxu0 0.0
        %1255 = vmatpush2.xpose.msra.mxu0 %v1185
        %1256 = vmatprep.subr.mxu0 0.0
        %1257 = vmatpush2.xpose.msra.mxu0 %v1184
        %1258 = vmatprep.subr.mxu0 0.0
        %1259 = vmatpush2.xpose.msra.mxu0 %v1183
        %1260 = vmatprep.subr.mxu0 0.0
        %1261 = vmatpush2.xpose.msra.mxu0 %v1182
        %1262 = vmatprep.mubr.f32.mxu0 0.0
        %1263 = vmatmul.mubr.f32.gmra.mxu0 %v1088
        %v1264 = vpop.f32.mrf.mxu0
        %v1265 = vadd.f32 0.0, %v1264
        %v1266 = vpop.f32.mrf.mxu0
        %v1267 = vadd.f32 0.0, %v1266
        %1268 = vmatprep.mubr.f32.mxu0 0.0
        %1269 = vmatmul.mubr.f32.gmra.mxu0 %v1093
        %v1270 = vpop.f32.mrf.mxu0
        %v1271 = vadd.f32 0.0, %v1270
        %v1272 = vpop.f32.mrf.mxu0
        %v1273 = vadd.f32 0.0, %v1272
        %1274 = vmatprep.mubr.f32.mxu0 0.0
        %1275 = vmatmul.mubr.f32.gmra.mxu0 %v1098
        %v1276 = vpop.f32.mrf.mxu0
        %v1277 = vadd.f32 0.0, %v1276
        %v1278 = vpop.f32.mrf.mxu0
        %v1279 = vadd.f32 0.0, %v1278
        %1280 = vmatprep.mubr.f32.mxu0 0.0
        %1281 = vmatmul.mubr.f32.gmra.mxu0 %v1103
        %v1282 = vpop.f32.mrf.mxu0
        %v1283 = vadd.f32 0.0, %v1282
        %v1284 = vpop.f32.mrf.mxu0
        %v1285 = vadd.f32 0.0, %v1284
        %1286 = vmatprep.mubr.f32.mxu0 0.0
        %1287 = vmatmul.mubr.f32.gmra.mxu0 %v1108
        %v1288 = vpop.f32.mrf.mxu0
        %v1289 = vadd.f32 0.0, %v1288
        %v1290 = vpop.f32.mrf.mxu0
        %v1291 = vadd.f32 0.0, %v1290
        %1292 = vmatprep.mubr.f32.mxu0 0.0
        %1293 = vmatmul.mubr.f32.gmra.mxu0 %v1113
        %v1294 = vpop.f32.mrf.mxu0
        %v1295 = vadd.f32 0.0, %v1294
        %v1296 = vpop.f32.mrf.mxu0
        %v1297 = vadd.f32 0.0, %v1296
        %1298 = vmatprep.mubr.f32.mxu0 0.0
        %1299 = vmatmul.mubr.f32.gmra.mxu0 %v1118
        %v1300 = vpop.f32.mrf.mxu0
        %v1301 = vadd.f32 0.0, %v1300
        %v1302 = vpop.f32.mrf.mxu0
        %v1303 = vadd.f32 0.0, %v1302
        %1304 = vmatprep.mubr.f32.mxu0 0.0
        %1305 = vmatmul.mubr.f32.gmra.mxu0 %v1123
        %v1306 = vpop.f32.mrf.mxu0
        %v1307 = vadd.f32 0.0, %v1306
        %v1308 = vpop.f32.mrf.mxu0
        %v1309 = vadd.f32 0.0, %v1308
        %1310 = vmatprep.mubr.f32.mxu0 0.0
        %1311 = vmatmul.mubr.f32.gmra.mxu0 %v1128
        %v1312 = vpop.f32.mrf.mxu0
        %v1313 = vadd.f32 0.0, %v1312
        %v1314 = vpop.f32.mrf.mxu0
        %v1315 = vadd.f32 0.0, %v1314
        %1316 = vmatprep.mubr.f32.mxu0 0.0
        %1317 = vmatmul.mubr.f32.gmra.mxu0 %v1133
        %v1318 = vpop.f32.mrf.mxu0
        %v1319 = vadd.f32 0.0, %v1318
        %v1320 = vpop.f32.mrf.mxu0
        %v1321 = vadd.f32 0.0, %v1320
        %1322 = vmatprep.mubr.f32.mxu0 0.0
        %1323 = vmatmul.mubr.f32.gmra.mxu0 %v1138
        %v1324 = vpop.f32.mrf.mxu0
        %v1325 = vadd.f32 0.0, %v1324
        %v1326 = vpop.f32.mrf.mxu0
        %v1327 = vadd.f32 0.0, %v1326
        %1328 = vmatprep.mubr.f32.mxu0 0.0
        %1329 = vmatmul.mubr.f32.gmra.mxu0 %v1143
        %v1330 = vpop.f32.mrf.mxu0
        %v1331 = vadd.f32 0.0, %v1330
        %v1332 = vpop.f32.mrf.mxu0
        %v1333 = vadd.f32 0.0, %v1332
        %1334 = vmatprep.mubr.f32.mxu0 0.0
        %1335 = vmatmul.mubr.f32.gmra.mxu0 %v1148
        %v1336 = vpop.f32.mrf.mxu0
        %v1337 = vadd.f32 0.0, %v1336
        %v1338 = vpop.f32.mrf.mxu0
        %v1339 = vadd.f32 0.0, %v1338
        %1340 = vmatprep.mubr.f32.mxu0 0.0
        %1341 = vmatmul.mubr.f32.gmra.mxu0 %v1153
        %v1342 = vpop.f32.mrf.mxu0
        %v1343 = vadd.f32 0.0, %v1342
        %v1344 = vpop.f32.mrf.mxu0
        %v1345 = vadd.f32 0.0, %v1344
        %1346 = vmatprep.mubr.f32.mxu0 0.0
        %1347 = vmatmul.mubr.f32.gmra.mxu0 %v1158
        %v1348 = vpop.f32.mrf.mxu0
        %v1349 = vadd.f32 0.0, %v1348
        %v1350 = vpop.f32.mrf.mxu0
        %v1351 = vadd.f32 0.0, %v1350
        %1352 = vmatprep.mubr.f32.mxu0 0.0
        %1353 = vmatmul.mubr.f32.gmra.mxu0 %v1163
        %v1354 = vpop.f32.mrf.mxu0
        %v1355 = vadd.f32 0.0, %v1354
        %v1356 = vpop.f32.mrf.mxu0
        %v1357 = vadd.f32 0.0, %v1356
        %1358 = vdwg.mxu0
        %v1359 = vmax.f32 %v1265, %v1267
        %1360 = vmax.xlane.f32.xlu0 %v1359
        %v1361 = vpop.xlane.xlu0 %1360
        %v1362 = vmax.f32 %v1271, %v1273
        %1363 = vmax.xlane.f32.xlu0 %v1362
        %v1364 = vpop.xlane.xlu0 %1363
        %v1365 = vmax.f32 %v1277, %v1279
        %1366 = vmax.xlane.f32.xlu0 %v1365
        %v1367 = vpop.xlane.xlu0 %1366
        %v1368 = vmax.f32 %v1283, %v1285
        %1369 = vmax.xlane.f32.xlu0 %v1368
        %v1370 = vpop.xlane.xlu0 %1369
        %v1371 = vmax.f32 %v1289, %v1291
        %1372 = vmax.xlane.f32.xlu0 %v1371
        %v1373 = vpop.xlane.xlu0 %1372
        %v1374 = vmax.f32 %v1295, %v1297
        %1375 = vmax.xlane.f32.xlu0 %v1374
        %v1376 = vpop.xlane.xlu0 %1375
        %v1377 = vmax.f32 %v1301, %v1303
        %1378 = vmax.xlane.f32.xlu0 %v1377
        %v1379 = vpop.xlane.xlu0 %1378
        %v1380 = vmax.f32 %v1307, %v1309
        %1381 = vmax.xlane.f32.xlu0 %v1380
        %v1382 = vpop.xlane.xlu0 %1381
        %v1383 = vmax.f32 %v1313, %v1315
        %1384 = vmax.xlane.f32.xlu0 %v1383
        %v1385 = vpop.xlane.xlu0 %1384
        %v1386 = vmax.f32 %v1319, %v1321
        %1387 = vmax.xlane.f32.xlu0 %v1386
        %v1388 = vpop.xlane.xlu0 %1387
        %v1389 = vmax.f32 %v1325, %v1327
        %1390 = vmax.xlane.f32.xlu0 %v1389
        %v1391 = vpop.xlane.xlu0 %1390
        %v1392 = vmax.f32 %v1331, %v1333
        %1393 = vmax.xlane.f32.xlu0 %v1392
        %v1394 = vpop.xlane.xlu0 %1393
        %v1395 = vmax.f32 %v1337, %v1339
        %1396 = vmax.xlane.f32.xlu0 %v1395
        %v1397 = vpop.xlane.xlu0 %1396
        %v1398 = vmax.f32 %v1343, %v1345
        %1399 = vmax.xlane.f32.xlu0 %v1398
        %v1400 = vpop.xlane.xlu0 %1399
        %v1401 = vmax.f32 %v1349, %v1351
        %1402 = vmax.xlane.f32.xlu0 %v1401
        %v1403 = vpop.xlane.xlu0 %1402
        %v1404 = vmax.f32 %v1355, %v1357
        %1405 = vmax.xlane.f32.xlu0 %v1404
        %v1406 = vpop.xlane.xlu0 %1405
        %v1407 = vsub.f32 %v1265, %v1361
        %v1408 = vsub.f32 %v1267, %v1361
        %v1409 = vsub.f32 %v1271, %v1364
        %v1410 = vsub.f32 %v1273, %v1364
        %v1411 = vsub.f32 %v1277, %v1367
        %v1412 = vsub.f32 %v1279, %v1367
        %v1413 = vsub.f32 %v1283, %v1370
        %v1414 = vsub.f32 %v1285, %v1370
        %v1415 = vsub.f32 %v1289, %v1373
        %v1416 = vsub.f32 %v1291, %v1373
        %v1417 = vsub.f32 %v1295, %v1376
        %v1418 = vsub.f32 %v1297, %v1376
        %v1419 = vsub.f32 %v1301, %v1379
        %v1420 = vsub.f32 %v1303, %v1379
        %v1421 = vsub.f32 %v1307, %v1382
        %v1422 = vsub.f32 %v1309, %v1382
        %v1423 = vsub.f32 %v1313, %v1385
        %v1424 = vsub.f32 %v1315, %v1385
        %v1425 = vsub.f32 %v1319, %v1388
        %v1426 = vsub.f32 %v1321, %v1388
        %v1427 = vsub.f32 %v1325, %v1391
        %v1428 = vsub.f32 %v1327, %v1391
        %v1429 = vsub.f32 %v1331, %v1394
        %v1430 = vsub.f32 %v1333, %v1394
        %v1431 = vsub.f32 %v1337, %v1397
        %v1432 = vsub.f32 %v1339, %v1397
        %v1433 = vsub.f32 %v1343, %v1400
        %v1434 = vsub.f32 %v1345, %v1400
        %v1435 = vsub.f32 %v1349, %v1403
        %v1436 = vsub.f32 %v1351, %v1403
        %v1437 = vsub.f32 %v1355, %v1406
        %v1438 = vsub.f32 %v1357, %v1406
        %v1439 = vmul.f32 %v1407, 1.442695
        %v1440 = vpow.pop %v1439
        %v1441 = vmul.f32 %v1408, 1.442695
        %v1442 = vpow.pop %v1441
        %v1443 = vmul.f32 %v1409, 1.442695
        %v1444 = vpow.pop %v1443
        %v1445 = vmul.f32 %v1410, 1.442695
        %v1446 = vpow.pop %v1445
        %v1447 = vmul.f32 %v1411, 1.442695
        %v1448 = vpow.pop %v1447
        %v1449 = vmul.f32 %v1412, 1.442695
        %v1450 = vpow.pop %v1449
        %v1451 = vmul.f32 %v1413, 1.442695
        %v1452 = vpow.pop %v1451
        %v1453 = vmul.f32 %v1414, 1.442695
        %v1454 = vpow.pop %v1453
        %v1455 = vmul.f32 %v1415, 1.442695
        %v1456 = vpow.pop %v1455
        %v1457 = vmul.f32 %v1416, 1.442695
        %v1458 = vpow.pop %v1457
        %v1459 = vmul.f32 %v1417, 1.442695
        %v1460 = vpow.pop %v1459
        %v1461 = vmul.f32 %v1418, 1.442695
        %v1462 = vpow.pop %v1461
        %v1463 = vmul.f32 %v1419, 1.442695
        %v1464 = vpow.pop %v1463
        %v1465 = vmul.f32 %v1420, 1.442695
        %v1466 = vpow.pop %v1465
        %v1467 = vmul.f32 %v1421, 1.442695
        %v1468 = vpow.pop %v1467
        %v1469 = vmul.f32 %v1422, 1.442695
        %v1470 = vpow.pop %v1469
        %v1471 = vmul.f32 %v1423, 1.442695
        %v1472 = vpow.pop %v1471
        %v1473 = vmul.f32 %v1424, 1.442695
        %v1474 = vpow.pop %v1473
        %v1475 = vmul.f32 %v1425, 1.442695
        %v1476 = vpow.pop %v1475
        %v1477 = vmul.f32 %v1426, 1.442695
        %v1478 = vpow.pop %v1477
        %v1479 = vmul.f32 %v1427, 1.442695
        %v1480 = vpow.pop %v1479
        %v1481 = vmul.f32 %v1428, 1.442695
        %v1482 = vpow.pop %v1481
        %v1483 = vmul.f32 %v1429, 1.442695
        %v1484 = vpow.pop %v1483
        %v1485 = vmul.f32 %v1430, 1.442695
        %v1486 = vpow.pop %v1485
        %v1487 = vmul.f32 %v1431, 1.442695
        %v1488 = vpow.pop %v1487
        %v1489 = vmul.f32 %v1432, 1.442695
        %v1490 = vpow.pop %v1489
        %v1491 = vmul.f32 %v1433, 1.442695
        %v1492 = vpow.pop %v1491
        %v1493 = vmul.f32 %v1434, 1.442695
        %v1494 = vpow.pop %v1493
        %v1495 = vmul.f32 %v1435, 1.442695
        %v1496 = vpow.pop %v1495
        %v1497 = vmul.f32 %v1436, 1.442695
        %v1498 = vpow.pop %v1497
        %v1499 = vmul.f32 %v1437, 1.442695
        %v1500 = vpow.pop %v1499
        %v1501 = vmul.f32 %v1438, 1.442695
        %v1502 = vpow.pop %v1501
        %v1503 = vadd.f32 %v1440, %v1442
        %1504 = vadd.xlane.f32.xlu0 %v1503
        %v1505 = vpop.xlane.xlu0 %1504
        %v1506 = vadd.f32 %v1444, %v1446
        %1507 = vadd.xlane.f32.xlu0 %v1506
        %v1508 = vpop.xlane.xlu0 %1507
        %v1509 = vadd.f32 %v1448, %v1450
        %1510 = vadd.xlane.f32.xlu0 %v1509
        %v1511 = vpop.xlane.xlu0 %1510
        %v1512 = vadd.f32 %v1452, %v1454
        %1513 = vadd.xlane.f32.xlu0 %v1512
        %v1514 = vpop.xlane.xlu0 %1513
        %v1515 = vadd.f32 %v1456, %v1458
        %1516 = vadd.xlane.f32.xlu0 %v1515
        %v1517 = vpop.xlane.xlu0 %1516
        %v1518 = vadd.f32 %v1460, %v1462
        %1519 = vadd.xlane.f32.xlu0 %v1518
        %v1520 = vpop.xlane.xlu0 %1519
        %v1521 = vadd.f32 %v1464, %v1466
        %1522 = vadd.xlane.f32.xlu0 %v1521
        %v1523 = vpop.xlane.xlu0 %1522
        %v1524 = vadd.f32 %v1468, %v1470
        %1525 = vadd.xlane.f32.xlu0 %v1524
        %v1526 = vpop.xlane.xlu0 %1525
        %v1527 = vadd.f32 %v1472, %v1474
        %1528 = vadd.xlane.f32.xlu0 %v1527
        %v1529 = vpop.xlane.xlu0 %1528
        %v1530 = vadd.f32 %v1476, %v1478
        %1531 = vadd.xlane.f32.xlu0 %v1530
        %v1532 = vpop.xlane.xlu0 %1531
        %v1533 = vadd.f32 %v1480, %v1482
        %1534 = vadd.xlane.f32.xlu0 %v1533
        %v1535 = vpop.xlane.xlu0 %1534
        %v1536 = vadd.f32 %v1484, %v1486
        %1537 = vadd.xlane.f32.xlu0 %v1536
        %v1538 = vpop.xlane.xlu0 %1537
        %v1539 = vadd.f32 %v1488, %v1490
        %1540 = vadd.xlane.f32.xlu0 %v1539
        %v1541 = vpop.xlane.xlu0 %1540
        %v1542 = vadd.f32 %v1492, %v1494
        %1543 = vadd.xlane.f32.xlu0 %v1542
        %v1544 = vpop.xlane.xlu0 %1543
        %v1545 = vadd.f32 %v1496, %v1498
        %1546 = vadd.xlane.f32.xlu0 %v1545
        %v1547 = vpop.xlane.xlu0 %1546
        %v1548 = vadd.f32 %v1500, %v1502
        %1549 = vadd.xlane.f32.xlu0 %v1548
        %v1550 = vpop.xlane.xlu0 %1549
        %v1551 = vrcp.pop %v1505
        %v1552 = vmul.f32 %v1440, %v1551
        %v1553 = vmul.f32 %v1442, %v1551
        %v1554 = vrcp.pop %v1508
        %v1555 = vmul.f32 %v1444, %v1554
        %v1556 = vmul.f32 %v1446, %v1554
        %v1557 = vrcp.pop %v1511
        %v1558 = vmul.f32 %v1448, %v1557
        %v1559 = vmul.f32 %v1450, %v1557
        %v1560 = vrcp.pop %v1514
        %v1561 = vmul.f32 %v1452, %v1560
        %v1562 = vmul.f32 %v1454, %v1560
        %v1563 = vrcp.pop %v1517
        %v1564 = vmul.f32 %v1456, %v1563
        %v1565 = vmul.f32 %v1458, %v1563
        %v1566 = vrcp.pop %v1520
        %v1567 = vmul.f32 %v1460, %v1566
        %v1568 = vmul.f32 %v1462, %v1566
        %v1569 = vrcp.pop %v1523
        %v1570 = vmul.f32 %v1464, %v1569
        %v1571 = vmul.f32 %v1466, %v1569
        %v1572 = vrcp.pop %v1526
        %v1573 = vmul.f32 %v1468, %v1572
        %v1574 = vmul.f32 %v1470, %v1572
        %v1575 = vrcp.pop %v1529
        %v1576 = vmul.f32 %v1472, %v1575
        %v1577 = vmul.f32 %v1474, %v1575
        %v1578 = vrcp.pop %v1532
        %v1579 = vmul.f32 %v1476, %v1578
        %v1580 = vmul.f32 %v1478, %v1578
        %v1581 = vrcp.pop %v1535
        %v1582 = vmul.f32 %v1480, %v1581
        %v1583 = vmul.f32 %v1482, %v1581
        %v1584 = vrcp.pop %v1538
        %v1585 = vmul.f32 %v1484, %v1584
        %v1586 = vmul.f32 %v1486, %v1584
        %v1587 = vrcp.pop %v1541
        %v1588 = vmul.f32 %v1488, %v1587
        %v1589 = vmul.f32 %v1490, %v1587
        %v1590 = vrcp.pop %v1544
        %v1591 = vmul.f32 %v1492, %v1590
        %v1592 = vmul.f32 %v1494, %v1590
        %v1593 = vrcp.pop %v1547
        %v1594 = vmul.f32 %v1496, %v1593
        %v1595 = vmul.f32 %v1498, %v1593
        %v1596 = vrcp.pop %v1550
        %v1597 = vmul.f32 %v1500, %v1596
        %v1598 = vmul.f32 %v1502, %v1596
        %v1599 = vld [vmem:[#allocation3] sm:$0xff]
        %v1600 = vld [vmem:[#allocation3 + $0x8] sm:$0xff]
        %v1601 = vld [vmem:[#allocation3 + $0x10] sm:$0xff]
        %v1602 = vld [vmem:[#allocation3 + $0x18] sm:$0xff]
        %v1603 = vld [vmem:[#allocation3 + $0x20] sm:$0xff]
        %v1604 = vld [vmem:[#allocation3 + $0x28] sm:$0xff]
        %v1605 = vld [vmem:[#allocation3 + $0x30] sm:$0xff]
        %v1606 = vld [vmem:[#allocation3 + $0x38] sm:$0xff]
        %v1607 = vld [vmem:[#allocation3 + $0x40] sm:$0xff]
        %v1608 = vld [vmem:[#allocation3 + $0x48] sm:$0xff]
        %v1609 = vld [vmem:[#allocation3 + $0x50] sm:$0xff]
        %v1610 = vld [vmem:[#allocation3 + $0x58] sm:$0xff]
        %v1611 = vld [vmem:[#allocation3 + $0x60] sm:$0xff]
        %v1612 = vld [vmem:[#allocation3 + $0x68] sm:$0xff]
        %v1613 = vld [vmem:[#allocation3 + $0x70] sm:$0xff]
        %v1614 = vld [vmem:[#allocation3 + $0x78] sm:$0xff]
        %v1615 = vld [vmem:[#allocation3 + $0x80] sm:$0xff]
        %v1616 = vld [vmem:[#allocation3 + $0x88] sm:$0xff]
        %v1617 = vld [vmem:[#allocation3 + $0x90] sm:$0xff]
        %v1618 = vld [vmem:[#allocation3 + $0x98] sm:$0xff]
        %v1619 = vld [vmem:[#allocation3 + $0xa0] sm:$0xff]
        %v1620 = vld [vmem:[#allocation3 + $0xa8] sm:$0xff]
        %v1621 = vld [vmem:[#allocation3 + $0xb0] sm:$0xff]
        %v1622 = vld [vmem:[#allocation3 + $0xb8] sm:$0xff]
        %v1623 = vld [vmem:[#allocation3 + $0xc0] sm:$0xff]
        %v1624 = vld [vmem:[#allocation3 + $0xc8] sm:$0xff]
        %v1625 = vld [vmem:[#allocation3 + $0xd0] sm:$0xff]
        %v1626 = vld [vmem:[#allocation3 + $0xd8] sm:$0xff]
        %v1627 = vld [vmem:[#allocation3 + $0xe0] sm:$0xff]
        %v1628 = vld [vmem:[#allocation3 + $0xe8] sm:$0xff]
        %v1629 = vld [vmem:[#allocation3 + $0xf0] sm:$0xff]
        %v1630 = vld [vmem:[#allocation3 + $0xf8] sm:$0xff]
        %1631 = vmatprep.subr.mxu0 0.0
        %1632 = vmatpush1.msra.mxu0 %v1614
        %1633 = vmatprep.subr.mxu0 0.0
        %1634 = vmatpush1.msra.mxu0 %v1613
        %1635 = vmatprep.subr.mxu0 0.0
        %1636 = vmatpush1.msra.mxu0 %v1612
        %1637 = vmatprep.subr.mxu0 0.0
        %1638 = vmatpush1.msra.mxu0 %v1611
        %1639 = vmatprep.subr.mxu0 0.0
        %1640 = vmatpush1.msra.mxu0 %v1610
        %1641 = vmatprep.subr.mxu0 0.0
        %1642 = vmatpush1.msra.mxu0 %v1609
        %1643 = vmatprep.subr.mxu0 0.0
        %1644 = vmatpush1.msra.mxu0 %v1608
        %1645 = vmatprep.subr.mxu0 0.0
        %1646 = vmatpush1.msra.mxu0 %v1607
        %1647 = vmatprep.subr.mxu0 0.0
        %1648 = vmatpush1.msra.mxu0 %v1606
        %1649 = vmatprep.subr.mxu0 0.0
        %1650 = vmatpush1.msra.mxu0 %v1605
        %1651 = vmatprep.subr.mxu0 0.0
        %1652 = vmatpush1.msra.mxu0 %v1604
        %1653 = vmatprep.subr.mxu0 0.0
        %1654 = vmatpush1.msra.mxu0 %v1603
        %1655 = vmatprep.subr.mxu0 0.0
        %1656 = vmatpush1.msra.mxu0 %v1602
        %1657 = vmatprep.subr.mxu0 0.0
        %1658 = vmatpush1.msra.mxu0 %v1601
        %1659 = vmatprep.subr.mxu0 0.0
        %1660 = vmatpush1.msra.mxu0 %v1600
        %1661 = vmatprep.subr.mxu0 0.0
        %1662 = vmatpush1.msra.mxu0 %v1599
        %1663 = vmatprep.subr.mxu0 0.0
        %1664 = vmatpush2.msra.mxu0 %v1630
        %1665 = vmatprep.subr.mxu0 0.0
        %1666 = vmatpush2.msra.mxu0 %v1629
        %1667 = vmatprep.subr.mxu0 0.0
        %1668 = vmatpush2.msra.mxu0 %v1628
        %1669 = vmatprep.subr.mxu0 0.0
        %1670 = vmatpush2.msra.mxu0 %v1627
        %1671 = vmatprep.subr.mxu0 0.0
        %1672 = vmatpush2.msra.mxu0 %v1626
        %1673 = vmatprep.subr.mxu0 0.0
        %1674 = vmatpush2.msra.mxu0 %v1625
        %1675 = vmatprep.subr.mxu0 0.0
        %1676 = vmatpush2.msra.mxu0 %v1624
        %1677 = vmatprep.subr.mxu0 0.0
        %1678 = vmatpush2.msra.mxu0 %v1623
        %1679 = vmatprep.subr.mxu0 0.0
        %1680 = vmatpush2.msra.mxu0 %v1622
        %1681 = vmatprep.subr.mxu0 0.0
        %1682 = vmatpush2.msra.mxu0 %v1621
        %1683 = vmatprep.subr.mxu0 0.0
        %1684 = vmatpush2.msra.mxu0 %v1620
        %1685 = vmatprep.subr.mxu0 0.0
        %1686 = vmatpush2.msra.mxu0 %v1619
        %1687 = vmatprep.subr.mxu0 0.0
        %1688 = vmatpush2.msra.mxu0 %v1618
        %1689 = vmatprep.subr.mxu0 0.0
        %1690 = vmatpush2.msra.mxu0 %v1617
        %1691 = vmatprep.subr.mxu0 0.0
        %1692 = vmatpush2.msra.mxu0 %v1616
        %1693 = vmatprep.subr.mxu0 0.0
        %1694 = vmatpush2.msra.mxu0 %v1615
        %1695 = vmatprep.mubr.f32.mxu0 %v1553
        %1696 = vmatmul.mubr.f32.gmra.mxu0 %v1552
        %v1697 = vpop.f32.mrf.mxu0
        %v1698 = vadd.f32 0.0, %v1697
        %v1699 = vpop.f32.mrf.mxu0
        %1700 = vmatprep.mubr.f32.mxu0 %v1556
        %1701 = vmatmul.mubr.f32.gmra.mxu0 %v1555
        %v1702 = vpop.f32.mrf.mxu0
        %v1703 = vadd.f32 0.0, %v1702
        %v1704 = vpop.f32.mrf.mxu0
        %1705 = vmatprep.mubr.f32.mxu0 %v1559
        %1706 = vmatmul.mubr.f32.gmra.mxu0 %v1558
        %v1707 = vpop.f32.mrf.mxu0
        %v1708 = vadd.f32 0.0, %v1707
        %v1709 = vpop.f32.mrf.mxu0
        %1710 = vmatprep.mubr.f32.mxu0 %v1562
        %1711 = vmatmul.mubr.f32.gmra.mxu0 %v1561
        %v1712 = vpop.f32.mrf.mxu0
        %v1713 = vadd.f32 0.0, %v1712
        %v1714 = vpop.f32.mrf.mxu0
        %1715 = vmatprep.mubr.f32.mxu0 %v1565
        %1716 = vmatmul.mubr.f32.gmra.mxu0 %v1564
        %v1717 = vpop.f32.mrf.mxu0
        %v1718 = vadd.f32 0.0, %v1717
        %v1719 = vpop.f32.mrf.mxu0
        %1720 = vmatprep.mubr.f32.mxu0 %v1568
        %1721 = vmatmul.mubr.f32.gmra.mxu0 %v1567
        %v1722 = vpop.f32.mrf.mxu0
        %v1723 = vadd.f32 0.0, %v1722
        %v1724 = vpop.f32.mrf.mxu0
        %1725 = vmatprep.mubr.f32.mxu0 %v1571
        %1726 = vmatmul.mubr.f32.gmra.mxu0 %v1570
        %v1727 = vpop.f32.mrf.mxu0
        %v1728 = vadd.f32 0.0, %v1727
        %v1729 = vpop.f32.mrf.mxu0
        %1730 = vmatprep.mubr.f32.mxu0 %v1574
        %1731 = vmatmul.mubr.f32.gmra.mxu0 %v1573
        %v1732 = vpop.f32.mrf.mxu0
        %v1733 = vadd.f32 0.0, %v1732
        %v1734 = vpop.f32.mrf.mxu0
        %1735 = vmatprep.mubr.f32.mxu0 %v1577
        %1736 = vmatmul.mubr.f32.gmra.mxu0 %v1576
        %v1737 = vpop.f32.mrf.mxu0
        %v1738 = vadd.f32 0.0, %v1737
        %v1739 = vpop.f32.mrf.mxu0
        %1740 = vmatprep.mubr.f32.mxu0 %v1580
        %1741 = vmatmul.mubr.f32.gmra.mxu0 %v1579
        %v1742 = vpop.f32.mrf.mxu0
        %v1743 = vadd.f32 0.0, %v1742
        %v1744 = vpop.f32.mrf.mxu0
        %1745 = vmatprep.mubr.f32.mxu0 %v1583
        %1746 = vmatmul.mubr.f32.gmra.mxu0 %v1582
        %v1747 = vpop.f32.mrf.mxu0
        %v1748 = vadd.f32 0.0, %v1747
        %v1749 = vpop.f32.mrf.mxu0
        %1750 = vmatprep.mubr.f32.mxu0 %v1586
        %1751 = vmatmul.mubr.f32.gmra.mxu0 %v1585
        %v1752 = vpop.f32.mrf.mxu0
        %v1753 = vadd.f32 0.0, %v1752
        %v1754 = vpop.f32.mrf.mxu0
        %1755 = vmatprep.mubr.f32.mxu0 %v1589
        %1756 = vmatmul.mubr.f32.gmra.mxu0 %v1588
        %v1757 = vpop.f32.mrf.mxu0
        %v1758 = vadd.f32 0.0, %v1757
        %v1759 = vpop.f32.mrf.mxu0
        %1760 = vmatprep.mubr.f32.mxu0 %v1592
        %1761 = vmatmul.mubr.f32.gmra.mxu0 %v1591
        %v1762 = vpop.f32.mrf.mxu0
        %v1763 = vadd.f32 0.0, %v1762
        %v1764 = vpop.f32.mrf.mxu0
        %1765 = vmatprep.mubr.f32.mxu0 %v1595
        %1766 = vmatmul.mubr.f32.gmra.mxu0 %v1594
        %v1767 = vpop.f32.mrf.mxu0
        %v1768 = vadd.f32 0.0, %v1767
        %v1769 = vpop.f32.mrf.mxu0
        %1770 = vmatprep.mubr.f32.mxu0 %v1598
        %1771 = vmatmul.mubr.f32.gmra.mxu0 %v1597
        %v1772 = vpop.f32.mrf.mxu0
        %v1773 = vadd.f32 0.0, %v1772
        %v1774 = vpop.f32.mrf.mxu0
        %1775 = vdwg.mxu0
        %s1776 = sld [smem:[#allocation4]]
        %v1777 = vstv %s1776
        %v1778 = vmul.f32 %v1777, %v1698
        %v1779 = vmul.f32 %v1777, %v1703
        %v1780 = vmul.f32 %v1777, %v1708
        %v1781 = vmul.f32 %v1777, %v1713
        %v1782 = vmul.f32 %v1777, %v1718
        %v1783 = vmul.f32 %v1777, %v1723
        %v1784 = vmul.f32 %v1777, %v1728
        %v1785 = vmul.f32 %v1777, %v1733
        %v1786 = vmul.f32 %v1777, %v1738
        %v1787 = vmul.f32 %v1777, %v1743
        %v1788 = vmul.f32 %v1777, %v1748
        %v1789 = vmul.f32 %v1777, %v1753
        %v1790 = vmul.f32 %v1777, %v1758
        %v1791 = vmul.f32 %v1777, %v1763
        %v1792 = vmul.f32 %v1777, %v1768
        %v1793 = vmul.f32 %v1777, %v1773
        %v1794 = vadd.f32 %v1778, %v982
        %v1795 = vadd.f32 %v1779, %v983
        %v1796 = vadd.f32 %v1780, %v984
        %v1797 = vadd.f32 %v1781, %v985
        %v1798 = vadd.f32 %v1782, %v986
        %v1799 = vadd.f32 %v1783, %v987
        %v1800 = vadd.f32 %v1784, %v988
        %v1801 = vadd.f32 %v1785, %v989
        %v1802 = vadd.f32 %v1786, %v990
        %v1803 = vadd.f32 %v1787, %v991
        %v1804 = vadd.f32 %v1788, %v992
        %v1805 = vadd.f32 %v1789, %v993
        %v1806 = vadd.f32 %v1790, %v994
        %v1807 = vadd.f32 %v1791, %v995
        %v1808 = vadd.f32 %v1792, %v996
        %v1809 = vadd.f32 %v1793, %v997
        %1810 = vst [vmem:[%s382] sm:$0xff] %v1794
        %1811 = vst [vmem:[%s382 + $0x8] sm:$0xff] %v1795
        %1812 = vst [vmem:[%s382 + $0x10] sm:$0xff] %v1796
        %1813 = vst [vmem:[%s382 + $0x18] sm:$0xff] %v1797
        %1814 = vst [vmem:[%s382 + $0x20] sm:$0xff] %v1798
        %1815 = vst [vmem:[%s382 + $0x28] sm:$0xff] %v1799
        %1816 = vst [vmem:[%s382 + $0x30] sm:$0xff] %v1800
        %1817 = vst [vmem:[%s382 + $0x38] sm:$0xff] %v1801
        %1818 = vst [vmem:[%s382 + $0x40] sm:$0xff] %v1802
        %1819 = vst [vmem:[%s382 + $0x48] sm:$0xff] %v1803
        %1820 = vst [vmem:[%s382 + $0x50] sm:$0xff] %v1804
        %1821 = vst [vmem:[%s382 + $0x58] sm:$0xff] %v1805
        %1822 = vst [vmem:[%s382 + $0x60] sm:$0xff] %v1806
        %1823 = vst [vmem:[%s382 + $0x68] sm:$0xff] %v1807
        %1824 = vst [vmem:[%s382 + $0x70] sm:$0xff] %v1808
        %1825 = vst [vmem:[%s382 + $0x78] sm:$0xff] %v1809
        %s1826 = sand.u32 %s223, 1
        %s1827 = scalar_lea.sflag [#allocation7], %s1826
        %s1828 = sand.u32 %s223, 1
        %s1829 = smul.addr %s1828, 128
        %s1830 = scalar_lea.vmem [#allocation13], %s1829
        // Predicated region
        $region73: #{tpu_custom_call.1} parent=51 // pred_check
          %p1831 = pneg %p233
        $region74: #{tpu_custom_call.1} parent=51 // pred_check_branch
          %1833 = sbr.rel (%p1831) target = $region76
        $region75: #{tpu_custom_call.1} parent=51 // pred_region
          %s1834 = smul.u32 16, %s33
          %s1836 = ssub.s32 2048, 2048
          %1837 = vsyncadd %s1827, %s1836
          %s1838 = smul.addr %s32, 32
          %s1839 = sadd.s32 %s1834, %s1838
          %s1840 = smul.addr %s1839, 128
          %s1841 = scalar_lea.hbm %s8, %s1840
          %s1842 = sshll.u32 %s1830, 4
          %s1843 = int_to_ptr.vmem [resolvable:$true] %s1842
          %1848 = dma.vmem_to_hbm [thread:$0]  %s1843, 2048, %s1841, %s1827, 128, 128, 8
        $region76: #{tpu_custom_call.1} parent=51 // pred_fallthru
          _
      $region52: #{tpu_custom_call.1} parent=5 // pred_fallthru
        _
      %p1849 = scmp.le.s32.totalorder 2, %s23
      // Predicated region
      $region77: #{tpu_custom_call.1} parent=5 // pred_check
        %p1850 = pneg %p1849
      $region78: #{tpu_custom_call.1} parent=5 // pred_check_branch
        %1852 = sbr.rel (%p1850) target = $region80
      $region79: #{tpu_custom_call.1} parent=5 // pred_region
        %s1853 = ssub.s32 %s23, 2
        // Predicated region
        $region81: #{tpu_custom_call.1} parent=79 // pred_check
          %p1854 = pneg %p239
        $region82: #{tpu_custom_call.1} parent=79 // pred_check_branch
          %1856 = sbr.rel (%p1854) target = $region84
        $region83: #{tpu_custom_call.1} parent=79 // pred_region
          %s1857 = sand.u32 %s224, 1
          %s1858 = scalar_lea.sflag [#allocation7], %s1857
          %s1859 = sand.u32 %s224, 1
          %s1860 = smul.addr %s1859, 128
          %s1861 = scalar_lea.vmem [#allocation13], %s1860
          %1862 = dma.done %s1858, 2048
        $region84: #{tpu_custom_call.1} parent=79 // pred_fallthru
          _
      $region80: #{tpu_custom_call.1} parent=5 // pred_fallthru
        _
    $region6: #{tpu_custom_call.1} parent=1 // loop_footer
      %s27 = sadd.s32 1, %s23
    $region7: #{tpu_custom_call.1} parent=1 // loop_footer_branch
      %22 = sbr.rel target = $region3
    $region8: #{tpu_custom_call.1} parent=1 // loop_exit
      _
    %1863 = vsyncpa [#allocation6], 1
    %s1864 = scalar_lea.sflag [#allocation6], 1
    %1865 = vsyncpa %s1864, 1
    %1866 = vsyncpa [#allocation9], 1
    %1867 = vsyncpa [#allocation12], 1
    %1868 = vsyncpa [#allocation7], 1
    %s1869 = scalar_lea.sflag [#allocation7], 1
    %1870 = vsyncpa %s1869, 1

</llo_original>
